<compile_context>
chip_gen: v5e
topology: v5e:2x2
jax: 0.10.0
libtpu: 0.0.40
codegen_flags: <defaults>
</compile_context>

<pallas_src>
import math
import functools

import jax
import jax.numpy as jnp
from jax.experimental import pallas as pl
from jax.experimental.pallas import tpu as pltpu


# ---------------------------------------------------------------------------
# Pallas kernel: a group of encoder layers for one (Bt, S, D) batch tile.
# ---------------------------------------------------------------------------
def encoder_layers_kernel(
    x_ref,      # (Bt, S, D)         f32
    wq_ref,     # (L, H, D, d_qk)    bf16
    bq_ref,     # (L, H, 1, d_qk)    f32
    wk_ref,     # (L, H, D, d_qk)    bf16
    bk_ref,     # (L, H, 1, d_qk)    f32
    wv_ref,     # (L, H, D, d_v)     bf16
    bv_ref,     # (L, H, 1, d_v)     f32
    wo_ref,     # (L, H, d_v, D)     bf16
    bo_ref,     # (L, 1, D)          f32
    w1_ref,     # (L, D, d_ff)       bf16
    b1_ref,     # (L, 1, d_ff)       f32
    w2_ref,     # (L, d_ff, D)       bf16
    b2_ref,     # (L, 1, D)          f32
    gamma_ref,  # (L, 1, D)          f32
    beta_ref,   # (L, 1, D)          f32
    o_ref,      # (Bt, S, D)         f32
    *,
    n_layers: int,
    n_heads: int,
    d_model: int,
    seq_len: int,
    block_b: int,
):
    f32 = jnp.float32
    bf16 = jnp.bfloat16
    rows = block_b * seq_len
    inv_scale = 1.0 / math.sqrt(d_model)   # PyTorch AttentionHead scales by sqrt(d_model)
    eps = 1e-5                             # nn.LayerNorm default

    def layer_norm(v, g, b):               # v: (rows, D) f32
        mean = jnp.mean(v, axis=-1, keepdims=True)
        var = jnp.mean((v - mean) ** 2, axis=-1, keepdims=True)
        return (v - mean) * jax.lax.rsqrt(var + eps) * g + b

    # Flatten batch tile into the matmul M-dimension.
    x2 = x_ref[...].reshape(rows, d_model)            # f32 (rows, D)

    for l in range(n_layers):
        xb = x2.astype(bf16)

        # ---- multi-headed attention (no concat: accumulate through wo_h) ----
        mha = jnp.zeros((rows, d_model), f32)
        for h in range(n_heads):
            q = jnp.dot(xb, wq_ref[l, h], preferred_element_type=f32) + bq_ref[l, h]
            k = jnp.dot(xb, wk_ref[l, h], preferred_element_type=f32) + bk_ref[l, h]
            v = jnp.dot(xb, wv_ref[l, h], preferred_element_type=f32) + bv_ref[l, h]

            q3 = q.reshape(block_b, seq_len, -1).astype(bf16)   # (Bt, S, d_qk)
            k3 = k.reshape(block_b, seq_len, -1).astype(bf16)
            v3 = v.reshape(block_b, seq_len, -1).astype(bf16)   # (Bt, S, d_v)

            # Batched scores, no explicit transpose; f32 softmax.
            s = jnp.einsum("bqd,bkd->bqk", q3, k3,
                           preferred_element_type=f32) * inv_scale
            s = s - jnp.max(s, axis=-1, keepdims=True)
            p = jnp.exp(s)
            p = p * pl.reciprocal(jnp.sum(p, axis=-1, keepdims=True), approx=True)

            ho = jnp.einsum("bqk,bkd->bqd", p.astype(bf16), v3,
                            preferred_element_type=f32)         # (Bt, S, d_v)
            mha = mha + jnp.dot(ho.reshape(rows, -1).astype(bf16),
                                wo_ref[l, h], preferred_element_type=f32)

        mha = mha + bo_ref[l]

        # ---- residual + LayerNorm (same gamma/beta reused, as in PyTorch) ---
        inter = layer_norm(mha + x2, gamma_ref[l], beta_ref[l])

        # ---- feed-forward -----------------------------------------------------
        h1 = jnp.dot(inter.astype(bf16), w1_ref[l],
                     preferred_element_type=f32) + b1_ref[l]
        h1 = jnp.maximum(h1, 0.0)
        ff = jnp.dot(h1.astype(bf16), w2_ref[l],
                     preferred_element_type=f32) + b2_ref[l]

        # ---- residual + LayerNorm --------------------------------------------
        x2 = layer_norm(inter + ff, gamma_ref[l], beta_ref[l])

    o_ref[...] = x2.reshape(block_b, seq_len, d_model).astype(o_ref.dtype)


# ---------------------------------------------------------------------------
# Wrapper helpers.
# ---------------------------------------------------------------------------
def _pick_block_b(B, S, target_rows=256):
    """Largest divisor of B such that block_b*S ~ target_rows (feed the MXU)."""
    cap = max(1, target_rows // max(S, 1))
    bt = 1
    for c in range(1, min(B, cap) + 1):
        if B % c == 0:
            bt = c
    return bt


def _stack_group_params(group, n_heads, d_qk, d_v):
    """Stack a group of layers' params (leading layer dim), split heads, cast
    matmul weights to bf16.  All of this happens in plain XLA, outside the
    kernel, so the kernel never lane-slices activations or weights."""
    bf16, f32 = jnp.bfloat16, jnp.float32

    def per_head_w(name, dh):     # (D, H*dh) -> (L, H, D, dh)
        return jnp.stack([
            p[name].reshape(p[name].shape[0], n_heads, dh).transpose(1, 0, 2)
            for p in group
        ]).astype(bf16)

    def per_head_b(name, dh):     # (1, H*dh) -> (L, H, 1, dh)
        return jnp.stack([
            p[name].reshape(n_heads, dh)[:, None, :] for p in group
        ]).astype(f32)

    def stack(name, dtype):
        return jnp.stack([p[name] for p in group]).astype(dtype)

    wo = jnp.stack([                                     # (L, H, d_v, D)
        p["wo"].reshape(n_heads, d_v, p["wo"].shape[1]) for p in group
    ]).astype(bf16)

    return dict(
        wq=per_head_w("wq", d_qk), bq=per_head_b("bq", d_qk),
        wk=per_head_w("wk", d_qk), bk=per_head_b("bk", d_qk),
        wv=per_head_w("wv", d_v),  bv=per_head_b("bv", d_v),
        wo=wo, bo=stack("bo", f32),
        w1=stack("w1", bf16), b1=stack("b1", f32),
        w2=stack("w2", bf16), b2=stack("b2", f32),
        gamma=stack("gamma", f32), beta=stack("beta", f32),
    )


def encoder_layers_pallas(x, group, *, n_heads, d_qk, d_v, block_b=None):
    """Run a group of encoder layers fused into a single pallas_call."""
    B, S, D = x.shape
    L = len(group)
    if block_b is None:
        block_b = _pick_block_b(B, S)
    assert B % block_b == 0

    stacked = _stack_group_params(group, n_heads, d_qk, d_v)
    order = ["wq", "bq", "wk", "bk", "wv", "bv", "wo", "bo",
             "w1", "b1", "w2", "b2", "gamma", "beta"]
    weight_args = [stacked[k] for k in order]

    def full_spec(a):                         # whole array resident, grid-invariant
        return pl.BlockSpec(a.shape, lambda b, _nd=a.ndim: (0,) * _nd)

    # VMEM budget: resident weights (x2 for buffering), in/out activation tiles,
    # plus rough per-layer intermediate headroom.
    def nbytes(a):
        return int(a.size) * a.dtype.itemsize

    d_ff = stacked["w1"].shape[-1]
    weight_bytes = sum(nbytes(a) for a in weight_args)
    io_bytes = 2 * 2 * block_b * S * D * 4
    act_bytes = 8 * block_b * S * max(D, d_ff, n_heads * max(d_qk, d_v)) * 4
    est = 2 * weight_bytes + io_bytes + act_bytes
    vmem_limit = int(min(max(est + (8 << 20), 32 << 20), 64 << 20))

    kernel = functools.partial(
        encoder_layers_kernel,
        n_layers=L, n_heads=n_heads, d_model=D, seq_len=S, block_b=block_b,
    )

    return pl.pallas_call(
        kernel,
        out_shape=jax.ShapeDtypeStruct((B, S, D), x.dtype),
        grid_spec=pltpu.PrefetchScalarGridSpec(
            num_scalar_prefetch=0,
            grid=(B // block_b,),
            in_specs=[pl.BlockSpec((block_b, S, D), lambda b: (b, 0, 0))]
                     + [full_spec(a) for a in weight_args],
            out_specs=pl.BlockSpec((block_b, S, D), lambda b: (b, 0, 0)),
        ),
        compiler_params=pltpu.CompilerParams(
            dimension_semantics=("parallel",),
            vmem_limit_bytes=vmem_limit,
        ),
    )(x, *weight_args)


def encoder_stack_pallas(x, layers, *, n_heads, d_qk, d_v,
                         weight_budget_bytes=24 << 20):
    """Run the full stack; layers are greedily grouped so each fused
    pallas_call's weights stay under a VMEM budget (hides per-layer DMA)."""
    def layer_weight_bytes(p):
        bf = lambda a: int(a.size) * 2     # cast to bf16 in the kernel
        f4 = lambda a: int(a.size) * 4
        return (bf(p["wq"]) + bf(p["wk"]) + bf(p["wv"]) + bf(p["wo"])
                + bf(p["w1"]) + bf(p["w2"])
                + f4(p["bq"]) + f4(p["bk"]) + f4(p["bv"]) + f4(p["bo"])
                + f4(p["b1"]) + f4(p["b2"]) + f4(p["gamma"]) + f4(p["beta"]))

    groups, cur, cur_bytes = [], [], 0
    for p in layers:
        lb = layer_weight_bytes(p)
        if cur and cur_bytes + lb > weight_budget_bytes:
            groups.append(cur)
            cur, cur_bytes = [], 0
        cur.append(p)
        cur_bytes += lb
    if cur:
        groups.append(cur)

    # TODO(synk): cross-pallas_call weight prefetch (semaphore/VMEM futures)
    # between groups is not implemented; groups currently pay a cold weight DMA.
    for g in groups:
        x = encoder_layers_pallas(x, g, n_heads=n_heads, d_qk=d_qk, d_v=d_v)
    return x


# ---------------------------------------------------------------------------
# Pure-JAX f32 reference (mirrors the PyTorch forward) for validation.
# ---------------------------------------------------------------------------
def encoder_layer_ref(x, p, *, n_heads, d_qk, d_v, d_model):
    def ln(v):
        mean = jnp.mean(v, axis=-1, keepdims=True)
        var = jnp.mean((v - mean) ** 2, axis=-1, keepdims=True)
        return (v - mean) / jnp.sqrt(var + 1e-5) * p["gamma"][0] + p["beta"][0]

    q = x @ p["wq"] + p["bq"][0]
    k = x @ p["wk"] + p["bk"][0]
    v = x @ p["wv"] + p["bv"][0]
    outs = []
    for h in range(n_heads):
        qh = q[..., h * d_qk:(h + 1) * d_qk]
        kh = k[..., h * d_qk:(h + 1) * d_qk]
        vh = v[..., h * d_v:(h + 1) * d_v]
        s = jnp.einsum("bsd,btd->bst", qh, kh) / math.sqrt(d_model)
        a = jax.nn.softmax(s, axis=-1)
        outs.append(jnp.einsum("bst,btd->bsd", a, vh))
    mha = jnp.concatenate(outs, axis=-1) @ p["wo"] + p["bo"][0]
    inter = ln(mha + x)
    ff = jnp.maximum(inter @ p["w1"] + p["b1"][0], 0.0) @ p["w2"] + p["b2"][0]
    return ln(inter + ff)


# ---------------------------------------------------------------------------
# Deterministic parameter construction (PyTorch shapes, pre-transposed to
# (in, out) for the kernel).
# ---------------------------------------------------------------------------
def make_layer_params(key, d_model, d_qk, d_v, d_ff, n_heads):
    ks = jax.random.split(key, 14)
    s = 0.05
    f32 = jnp.float32
    return {
        "wq": s * jax.random.normal(ks[0], (d_model, n_heads * d_qk), f32),
        "bq": s * jax.random.normal(ks[1], (1, n_heads * d_qk), f32),
        "wk": s * jax.random.normal(ks[2], (d_model, n_heads * d_qk), f32),
        "bk": s * jax.random.normal(ks[3], (1, n_heads * d_qk), f32),
        "wv": s * jax.random.normal(ks[4], (d_model, n_heads * d_v), f32),
        "bv": s * jax.random.normal(ks[5], (1, n_heads * d_v), f32),
        "wo": s * jax.random.normal(ks[6], (n_heads * d_v, d_model), f32),
        "bo": s * jax.random.normal(ks[7], (1, d_model), f32),
        "w1": s * jax.random.normal(ks[8], (d_model, d_ff), f32),
        "b1": s * jax.random.normal(ks[9], (1, d_ff), f32),
        "w2": s * jax.random.normal(ks[10], (d_ff, d_model), f32),
        "b2": s * jax.random.normal(ks[11], (1, d_model), f32),
        "gamma": 1.0 + s * jax.random.normal(ks[12], (1, d_model), f32),
        "beta": s * jax.random.normal(ks[13], (1, d_model), f32),
    }


if __name__ == "__main__":
    # Config (what ParameterProvider would supply).
    B, S = 2, 8
    d_model, d_qk, d_v, d_ff = 32, 16, 16, 64
    n_heads, n_encoders = 2, 2

    key = jax.random.PRNGKey(0)
    key, xkey = jax.random.split(key)
    x = jax.random.normal(xkey, (B, S, d_model), jnp.float32)

    layer_keys = jax.random.split(key, n_encoders)
    layers = [
        make_layer_params(layer_keys[i], d_model, d_qk, d_v, d_ff, n_heads)
        for i in range(n_encoders)
    ]

    out = encoder_stack_pallas(x, layers, n_heads=n_heads, d_qk=d_qk, d_v=d_v)
    out = jax.block_until_ready(out)

    # Validate against the f32 reference of the PyTorch forward.  Tolerance is
    # loosened because the kernel's matmul operands are bf16 (f32 accumulation).
    ref = x
    for p in layers:
        ref = encoder_layer_ref(ref, p, n_heads=n_heads, d_qk=d_qk, d_v=d_v,
                                d_model=d_model)
    ref = jax.block_until_ready(ref)

    if not jnp.allclose(out, ref, atol=5e-2, rtol=5e-2):
        raise AssertionError("Pallas EncoderStack output mismatch vs reference")

    print("KERNEL_OK")
</pallas_src>

<mosaic_0001>
module attributes {stable_mosaic.version = 11 : i64} {
  func.func @encoder_layers_kernel(%arg0: i32, %arg1: memref<2x8x32xf32, #tpu.memory_space<vmem>>, %arg2: memref<2x2x32x16xbf16, #tpu.memory_space<vmem>>, %arg3: memref<2x2x1x16xf32, #tpu.memory_space<vmem>>, %arg4: memref<2x2x32x16xbf16, #tpu.memory_space<vmem>>, %arg5: memref<2x2x1x16xf32, #tpu.memory_space<vmem>>, %arg6: memref<2x2x32x16xbf16, #tpu.memory_space<vmem>>, %arg7: memref<2x2x1x16xf32, #tpu.memory_space<vmem>>, %arg8: memref<2x2x16x32xbf16, #tpu.memory_space<vmem>>, %arg9: memref<2x1x32xf32, #tpu.memory_space<vmem>>, %arg10: memref<2x32x64xbf16, #tpu.memory_space<vmem>>, %arg11: memref<2x1x64xf32, #tpu.memory_space<vmem>>, %arg12: memref<2x64x32xbf16, #tpu.memory_space<vmem>>, %arg13: memref<2x1x32xf32, #tpu.memory_space<vmem>>, %arg14: memref<2x1x32xf32, #tpu.memory_space<vmem>>, %arg15: memref<2x1x32xf32, #tpu.memory_space<vmem>>, %arg16: memref<2x8x32xf32, #tpu.memory_space<vmem>>) attributes {dimension_semantics = [#tpu.dimension_semantics<parallel>], iteration_bounds = array<i64: 1>, scalar_prefetch = 0 : i64, scratch_operands = 0 : i64, tpu.core_type = #tpu.core_type<tc>, window_params = [{transform_indices = @transform_0, window_bounds = array<i64: 2, 8, 32>}, {pipeline_mode = #tpu.pipeline_mode<synchronous>, transform_indices = @transform_1, window_bounds = array<i64: 2, 2, 32, 16>}, {pipeline_mode = #tpu.pipeline_mode<synchronous>, transform_indices = @transform_2, window_bounds = array<i64: 2, 2, 1, 16>}, {pipeline_mode = #tpu.pipeline_mode<synchronous>, transform_indices = @transform_3, window_bounds = array<i64: 2, 2, 32, 16>}, {pipeline_mode = #tpu.pipeline_mode<synchronous>, transform_indices = @transform_4, window_bounds = array<i64: 2, 2, 1, 16>}, {pipeline_mode = #tpu.pipeline_mode<synchronous>, transform_indices = @transform_5, window_bounds = array<i64: 2, 2, 32, 16>}, {pipeline_mode = #tpu.pipeline_mode<synchronous>, transform_indices = @transform_6, window_bounds = array<i64: 2, 2, 1, 16>}, {pipeline_mode = #tpu.pipeline_mode<synchronous>, transform_indices = @transform_7, window_bounds = array<i64: 2, 2, 16, 32>}, {pipeline_mode = #tpu.pipeline_mode<synchronous>, transform_indices = @transform_8, window_bounds = array<i64: 2, 1, 32>}, {pipeline_mode = #tpu.pipeline_mode<synchronous>, transform_indices = @transform_9, window_bounds = array<i64: 2, 32, 64>}, {pipeline_mode = #tpu.pipeline_mode<synchronous>, transform_indices = @transform_10, window_bounds = array<i64: 2, 1, 64>}, {pipeline_mode = #tpu.pipeline_mode<synchronous>, transform_indices = @transform_11, window_bounds = array<i64: 2, 64, 32>}, {pipeline_mode = #tpu.pipeline_mode<synchronous>, transform_indices = @transform_12, window_bounds = array<i64: 2, 1, 32>}, {pipeline_mode = #tpu.pipeline_mode<synchronous>, transform_indices = @transform_13, window_bounds = array<i64: 2, 1, 32>}, {pipeline_mode = #tpu.pipeline_mode<synchronous>, transform_indices = @transform_14, window_bounds = array<i64: 2, 1, 32>}, {transform_indices = @transform_15, window_bounds = array<i64: 2, 8, 32>}]} {
    %c0 = arith.constant 0 : index
    %c0_0 = arith.constant 0 : index
    %c0_1 = arith.constant 0 : index
    %0 = vector.load %arg1[%c0, %c0_0, %c0_1] : memref<2x8x32xf32, #tpu.memory_space<vmem>>, vector<2x8x32xf32>
    %1 = vector.shape_cast %0 : vector<2x8x32xf32> to vector<16x32xf32>
    %2 = arith.truncf %1 : vector<16x32xf32> to vector<16x32xbf16>
    %cst = arith.constant 0.000000e+00 : f32
    %3 = vector.broadcast %cst : f32 to vector<16x32xf32>
    %c0_2 = arith.constant 0 : index
    %c0_3 = arith.constant 0 : index
    %c0_4 = arith.constant 0 : index
    %c0_5 = arith.constant 0 : index
    %4 = vector.load %arg2[%c0_2, %c0_3, %c0_4, %c0_5] : memref<2x2x32x16xbf16, #tpu.memory_space<vmem>>, vector<1x1x32x16xbf16>
    %5 = vector.shape_cast %4 : vector<1x1x32x16xbf16> to vector<32x16xbf16>
    %cst_6 = arith.constant dense<0.000000e+00> : vector<16x16xf32>
    %6 = tpu.matmul %2, %5, %cst_6 {dimension_numbers = #tpu.dot_dimension_numbers<[1], [0], [0], [1], [0, 0, 1, 1], [], []>} : vector<16x32xbf16>, vector<32x16xbf16>, vector<16x16xf32> -> vector<16x16xf32>
    %c0_7 = arith.constant 0 : index
    %c0_8 = arith.constant 0 : index
    %c0_9 = arith.constant 0 : index
    %c0_10 = arith.constant 0 : index
    %7 = vector.load %arg3[%c0_7, %c0_8, %c0_9, %c0_10] : memref<2x2x1x16xf32, #tpu.memory_space<vmem>>, vector<1x1x1x16xf32>
    %8 = vector.shape_cast %7 : vector<1x1x1x16xf32> to vector<1x16xf32>
    %9 = vector.broadcast %8 : vector<1x16xf32> to vector<16x16xf32>
    %10 = arith.addf %6, %9 : vector<16x16xf32>
    %c0_11 = arith.constant 0 : index
    %c0_12 = arith.constant 0 : index
    %c0_13 = arith.constant 0 : index
    %c0_14 = arith.constant 0 : index
    %11 = vector.load %arg4[%c0_11, %c0_12, %c0_13, %c0_14] : memref<2x2x32x16xbf16, #tpu.memory_space<vmem>>, vector<1x1x32x16xbf16>
    %12 = vector.shape_cast %11 : vector<1x1x32x16xbf16> to vector<32x16xbf16>
    %cst_15 = arith.constant dense<0.000000e+00> : vector<16x16xf32>
    %13 = tpu.matmul %2, %12, %cst_15 {dimension_numbers = #tpu.dot_dimension_numbers<[1], [0], [0], [1], [0, 0, 1, 1], [], []>} : vector<16x32xbf16>, vector<32x16xbf16>, vector<16x16xf32> -> vector<16x16xf32>
    %c0_16 = arith.constant 0 : index
    %c0_17 = arith.constant 0 : index
    %c0_18 = arith.constant 0 : index
    %c0_19 = arith.constant 0 : index
    %14 = vector.load %arg5[%c0_16, %c0_17, %c0_18, %c0_19] : memref<2x2x1x16xf32, #tpu.memory_space<vmem>>, vector<1x1x1x16xf32>
    %15 = vector.shape_cast %14 : vector<1x1x1x16xf32> to vector<1x16xf32>
    %16 = vector.broadcast %15 : vector<1x16xf32> to vector<16x16xf32>
    %17 = arith.addf %13, %16 : vector<16x16xf32>
    %c0_20 = arith.constant 0 : index
    %c0_21 = arith.constant 0 : index
    %c0_22 = arith.constant 0 : index
    %c0_23 = arith.constant 0 : index
    %18 = vector.load %arg6[%c0_20, %c0_21, %c0_22, %c0_23] : memref<2x2x32x16xbf16, #tpu.memory_space<vmem>>, vector<1x1x32x16xbf16>
    %19 = vector.shape_cast %18 : vector<1x1x32x16xbf16> to vector<32x16xbf16>
    %cst_24 = arith.constant dense<0.000000e+00> : vector<16x16xf32>
    %20 = tpu.matmul %2, %19, %cst_24 {dimension_numbers = #tpu.dot_dimension_numbers<[1], [0], [0], [1], [0, 0, 1, 1], [], []>} : vector<16x32xbf16>, vector<32x16xbf16>, vector<16x16xf32> -> vector<16x16xf32>
    %c0_25 = arith.constant 0 : index
    %c0_26 = arith.constant 0 : index
    %c0_27 = arith.constant 0 : index
    %c0_28 = arith.constant 0 : index
    %21 = vector.load %arg7[%c0_25, %c0_26, %c0_27, %c0_28] : memref<2x2x1x16xf32, #tpu.memory_space<vmem>>, vector<1x1x1x16xf32>
    %22 = vector.shape_cast %21 : vector<1x1x1x16xf32> to vector<1x16xf32>
    %23 = vector.broadcast %22 : vector<1x16xf32> to vector<16x16xf32>
    %24 = arith.addf %20, %23 : vector<16x16xf32>
    %25 = vector.shape_cast %10 : vector<16x16xf32> to vector<2x8x16xf32>
    %26 = arith.truncf %25 : vector<2x8x16xf32> to vector<2x8x16xbf16>
    %27 = vector.shape_cast %17 : vector<16x16xf32> to vector<2x8x16xf32>
    %28 = arith.truncf %27 : vector<2x8x16xf32> to vector<2x8x16xbf16>
    %29 = vector.shape_cast %24 : vector<16x16xf32> to vector<2x8x16xf32>
    %30 = arith.truncf %29 : vector<2x8x16xf32> to vector<2x8x16xbf16>
    "tpu.trace_start"() <{level = 10 : i32, message = "bqd,bkd->bqk"}> : () -> ()
    %cst_29 = arith.constant dense<0.000000e+00> : vector<2x8x8xf32>
    %31 = tpu.matmul %26, %28, %cst_29 {dimension_numbers = #tpu.dot_dimension_numbers<[2], [2], [1], [1], [0, 0, 0, 1, 1, 1], [0], [0]>} : vector<2x8x16xbf16>, vector<2x8x16xbf16>, vector<2x8x8xf32> -> vector<2x8x8xf32>
    "tpu.trace_stop"() : () -> ()
    %cst_30 = arith.constant 0.176776692 : f32
    %32 = vector.broadcast %cst_30 : f32 to vector<2x8x8xf32>
    %33 = arith.mulf %31, %32 : vector<2x8x8xf32>
    %cst_31 = arith.constant dense<0xFF800000> : vector<2x8xf32>
    %34 = vector.multi_reduction <maximumf>, %33, %cst_31 [2] : vector<2x8x8xf32> to vector<2x8xf32>
    %35 = vector.shape_cast %34 : vector<2x8xf32> to vector<2x8x1xf32>
    %36 = vector.broadcast %35 : vector<2x8x1xf32> to vector<2x8x8xf32>
    %37 = arith.subf %33, %36 : vector<2x8x8xf32>
    %38 = math.exp %37 : vector<2x8x8xf32>
    %cst_32 = arith.constant dense<0.000000e+00> : vector<2x8xf32>
    %39 = vector.multi_reduction <add>, %38, %cst_32 [2] : vector<2x8x8xf32> to vector<2x8xf32>
    %40 = vector.shape_cast %39 : vector<2x8xf32> to vector<2x8x1xf32>
    %41 = tpu.reciprocal %40 {approx = true} : vector<2x8x1xf32> -> vector<2x8x1xf32>
    %42 = vector.broadcast %41 : vector<2x8x1xf32> to vector<2x8x8xf32>
    %43 = arith.mulf %38, %42 : vector<2x8x8xf32>
    %44 = arith.truncf %43 : vector<2x8x8xf32> to vector<2x8x8xbf16>
    "tpu.trace_start"() <{level = 10 : i32, message = "bqk,bkd->bqd"}> : () -> ()
    %cst_33 = arith.constant dense<0.000000e+00> : vector<2x8x16xf32>
    %45 = tpu.matmul %44, %30, %cst_33 {dimension_numbers = #tpu.dot_dimension_numbers<[2], [1], [1], [2], [0, 0, 0, 1, 1, 2], [0], [0]>} : vector<2x8x8xbf16>, vector<2x8x16xbf16>, vector<2x8x16xf32> -> vector<2x8x16xf32>
    "tpu.trace_stop"() : () -> ()
    %46 = vector.shape_cast %45 : vector<2x8x16xf32> to vector<16x16xf32>
    %47 = arith.truncf %46 : vector<16x16xf32> to vector<16x16xbf16>
    %c0_34 = arith.constant 0 : index
    %c0_35 = arith.constant 0 : index
    %c0_36 = arith.constant 0 : index
    %c0_37 = arith.constant 0 : index
    %48 = vector.load %arg8[%c0_34, %c0_35, %c0_36, %c0_37] : memref<2x2x16x32xbf16, #tpu.memory_space<vmem>>, vector<1x1x16x32xbf16>
    %49 = vector.shape_cast %48 : vector<1x1x16x32xbf16> to vector<16x32xbf16>
    %cst_38 = arith.constant dense<0.000000e+00> : vector<16x32xf32>
    %50 = tpu.matmul %47, %49, %cst_38 {dimension_numbers = #tpu.dot_dimension_numbers<[1], [0], [0], [1], [0, 0, 1, 1], [], []>} : vector<16x16xbf16>, vector<16x32xbf16>, vector<16x32xf32> -> vector<16x32xf32>
    %51 = arith.addf %3, %50 : vector<16x32xf32>
    %c0_39 = arith.constant 0 : index
    %c1 = arith.constant 1 : index
    %c0_40 = arith.constant 0 : index
    %c0_41 = arith.constant 0 : index
    %52 = vector.load %arg2[%c0_39, %c1, %c0_40, %c0_41] : memref<2x2x32x16xbf16, #tpu.memory_space<vmem>>, vector<1x1x32x16xbf16>
    %53 = vector.shape_cast %52 : vector<1x1x32x16xbf16> to vector<32x16xbf16>
    %cst_42 = arith.constant dense<0.000000e+00> : vector<16x16xf32>
    %54 = tpu.matmul %2, %53, %cst_42 {dimension_numbers = #tpu.dot_dimension_numbers<[1], [0], [0], [1], [0, 0, 1, 1], [], []>} : vector<16x32xbf16>, vector<32x16xbf16>, vector<16x16xf32> -> vector<16x16xf32>
    %c0_43 = arith.constant 0 : index
    %c1_44 = arith.constant 1 : index
    %c0_45 = arith.constant 0 : index
    %c0_46 = arith.constant 0 : index
    %55 = vector.load %arg3[%c0_43, %c1_44, %c0_45, %c0_46] : memref<2x2x1x16xf32, #tpu.memory_space<vmem>>, vector<1x1x1x16xf32>
    %56 = vector.shape_cast %55 : vector<1x1x1x16xf32> to vector<1x16xf32>
    %57 = vector.broadcast %56 : vector<1x16xf32> to vector<16x16xf32>
    %58 = arith.addf %54, %57 : vector<16x16xf32>
    %c0_47 = arith.constant 0 : index
    %c1_48 = arith.constant 1 : index
    %c0_49 = arith.constant 0 : index
    %c0_50 = arith.constant 0 : index
    %59 = vector.load %arg4[%c0_47, %c1_48, %c0_49, %c0_50] : memref<2x2x32x16xbf16, #tpu.memory_space<vmem>>, vector<1x1x32x16xbf16>
    %60 = vector.shape_cast %59 : vector<1x1x32x16xbf16> to vector<32x16xbf16>
    %cst_51 = arith.constant dense<0.000000e+00> : vector<16x16xf32>
    %61 = tpu.matmul %2, %60, %cst_51 {dimension_numbers = #tpu.dot_dimension_numbers<[1], [0], [0], [1], [0, 0, 1, 1], [], []>} : vector<16x32xbf16>, vector<32x16xbf16>, vector<16x16xf32> -> vector<16x16xf32>
    %c0_52 = arith.constant 0 : index
    %c1_53 = arith.constant 1 : index
    %c0_54 = arith.constant 0 : index
    %c0_55 = arith.constant 0 : index
    %62 = vector.load %arg5[%c0_52, %c1_53, %c0_54, %c0_55] : memref<2x2x1x16xf32, #tpu.memory_space<vmem>>, vector<1x1x1x16xf32>
    %63 = vector.shape_cast %62 : vector<1x1x1x16xf32> to vector<1x16xf32>
    %64 = vector.broadcast %63 : vector<1x16xf32> to vector<16x16xf32>
    %65 = arith.addf %61, %64 : vector<16x16xf32>
    %c0_56 = arith.constant 0 : index
    %c1_57 = arith.constant 1 : index
    %c0_58 = arith.constant 0 : index
    %c0_59 = arith.constant 0 : index
    %66 = vector.load %arg6[%c0_56, %c1_57, %c0_58, %c0_59] : memref<2x2x32x16xbf16, #tpu.memory_space<vmem>>, vector<1x1x32x16xbf16>
    %67 = vector.shape_cast %66 : vector<1x1x32x16xbf16> to vector<32x16xbf16>
    %cst_60 = arith.constant dense<0.000000e+00> : vector<16x16xf32>
    %68 = tpu.matmul %2, %67, %cst_60 {dimension_numbers = #tpu.dot_dimension_numbers<[1], [0], [0], [1], [0, 0, 1, 1], [], []>} : vector<16x32xbf16>, vector<32x16xbf16>, vector<16x16xf32> -> vector<16x16xf32>
    %c0_61 = arith.constant 0 : index
    %c1_62 = arith.constant 1 : index
    %c0_63 = arith.constant 0 : index
    %c0_64 = arith.constant 0 : index
    %69 = vector.load %arg7[%c0_61, %c1_62, %c0_63, %c0_64] : memref<2x2x1x16xf32, #tpu.memory_space<vmem>>, vector<1x1x1x16xf32>
    %70 = vector.shape_cast %69 : vector<1x1x1x16xf32> to vector<1x16xf32>
    %71 = vector.broadcast %70 : vector<1x16xf32> to vector<16x16xf32>
    %72 = arith.addf %68, %71 : vector<16x16xf32>
    %73 = vector.shape_cast %58 : vector<16x16xf32> to vector<2x8x16xf32>
    %74 = arith.truncf %73 : vector<2x8x16xf32> to vector<2x8x16xbf16>
    %75 = vector.shape_cast %65 : vector<16x16xf32> to vector<2x8x16xf32>
    %76 = arith.truncf %75 : vector<2x8x16xf32> to vector<2x8x16xbf16>
    %77 = vector.shape_cast %72 : vector<16x16xf32> to vector<2x8x16xf32>
    %78 = arith.truncf %77 : vector<2x8x16xf32> to vector<2x8x16xbf16>
    "tpu.trace_start"() <{level = 10 : i32, message = "bqd,bkd->bqk"}> : () -> ()
    %cst_65 = arith.constant dense<0.000000e+00> : vector<2x8x8xf32>
    %79 = tpu.matmul %74, %76, %cst_65 {dimension_numbers = #tpu.dot_dimension_numbers<[2], [2], [1], [1], [0, 0, 0, 1, 1, 1], [0], [0]>} : vector<2x8x16xbf16>, vector<2x8x16xbf16>, vector<2x8x8xf32> -> vector<2x8x8xf32>
    "tpu.trace_stop"() : () -> ()
    %cst_66 = arith.constant 0.176776692 : f32
    %80 = vector.broadcast %cst_66 : f32 to vector<2x8x8xf32>
    %81 = arith.mulf %79, %80 : vector<2x8x8xf32>
    %cst_67 = arith.constant dense<0xFF800000> : vector<2x8xf32>
    %82 = vector.multi_reduction <maximumf>, %81, %cst_67 [2] : vector<2x8x8xf32> to vector<2x8xf32>
    %83 = vector.shape_cast %82 : vector<2x8xf32> to vector<2x8x1xf32>
    %84 = vector.broadcast %83 : vector<2x8x1xf32> to vector<2x8x8xf32>
    %85 = arith.subf %81, %84 : vector<2x8x8xf32>
    %86 = math.exp %85 : vector<2x8x8xf32>
    %cst_68 = arith.constant dense<0.000000e+00> : vector<2x8xf32>
    %87 = vector.multi_reduction <add>, %86, %cst_68 [2] : vector<2x8x8xf32> to vector<2x8xf32>
    %88 = vector.shape_cast %87 : vector<2x8xf32> to vector<2x8x1xf32>
    %89 = tpu.reciprocal %88 {approx = true} : vector<2x8x1xf32> -> vector<2x8x1xf32>
    %90 = vector.broadcast %89 : vector<2x8x1xf32> to vector<2x8x8xf32>
    %91 = arith.mulf %86, %90 : vector<2x8x8xf32>
    %92 = arith.truncf %91 : vector<2x8x8xf32> to vector<2x8x8xbf16>
    "tpu.trace_start"() <{level = 10 : i32, message = "bqk,bkd->bqd"}> : () -> ()
    %cst_69 = arith.constant dense<0.000000e+00> : vector<2x8x16xf32>
    %93 = tpu.matmul %92, %78, %cst_69 {dimension_numbers = #tpu.dot_dimension_numbers<[2], [1], [1], [2], [0, 0, 0, 1, 1, 2], [0], [0]>} : vector<2x8x8xbf16>, vector<2x8x16xbf16>, vector<2x8x16xf32> -> vector<2x8x16xf32>
    "tpu.trace_stop"() : () -> ()
    %94 = vector.shape_cast %93 : vector<2x8x16xf32> to vector<16x16xf32>
    %95 = arith.truncf %94 : vector<16x16xf32> to vector<16x16xbf16>
    %c0_70 = arith.constant 0 : index
    %c1_71 = arith.constant 1 : index
    %c0_72 = arith.constant 0 : index
    %c0_73 = arith.constant 0 : index
    %96 = vector.load %arg8[%c0_70, %c1_71, %c0_72, %c0_73] : memref<2x2x16x32xbf16, #tpu.memory_space<vmem>>, vector<1x1x16x32xbf16>
    %97 = vector.shape_cast %96 : vector<1x1x16x32xbf16> to vector<16x32xbf16>
    %cst_74 = arith.constant dense<0.000000e+00> : vector<16x32xf32>
    %98 = tpu.matmul %95, %97, %cst_74 {dimension_numbers = #tpu.dot_dimension_numbers<[1], [0], [0], [1], [0, 0, 1, 1], [], []>} : vector<16x16xbf16>, vector<16x32xbf16>, vector<16x32xf32> -> vector<16x32xf32>
    %99 = arith.addf %51, %98 : vector<16x32xf32>
    %c0_75 = arith.constant 0 : index
    %c0_76 = arith.constant 0 : index
    %c0_77 = arith.constant 0 : index
    %100 = vector.load %arg9[%c0_75, %c0_76, %c0_77] : memref<2x1x32xf32, #tpu.memory_space<vmem>>, vector<1x1x32xf32>
    %101 = vector.shape_cast %100 : vector<1x1x32xf32> to vector<1x32xf32>
    %102 = vector.broadcast %101 : vector<1x32xf32> to vector<16x32xf32>
    %103 = arith.addf %99, %102 : vector<16x32xf32>
    %104 = arith.addf %103, %1 : vector<16x32xf32>
    %c0_78 = arith.constant 0 : index
    %c0_79 = arith.constant 0 : index
    %c0_80 = arith.constant 0 : index
    %105 = vector.load %arg14[%c0_78, %c0_79, %c0_80] : memref<2x1x32xf32, #tpu.memory_space<vmem>>, vector<1x1x32xf32>
    %106 = vector.shape_cast %105 : vector<1x1x32xf32> to vector<1x32xf32>
    %c0_81 = arith.constant 0 : index
    %c0_82 = arith.constant 0 : index
    %c0_83 = arith.constant 0 : index
    %107 = vector.load %arg15[%c0_81, %c0_82, %c0_83] : memref<2x1x32xf32, #tpu.memory_space<vmem>>, vector<1x1x32xf32>
    %108 = vector.shape_cast %107 : vector<1x1x32xf32> to vector<1x32xf32>
    %cst_84 = arith.constant dense<0.000000e+00> : vector<16xf32>
    %109 = vector.multi_reduction <add>, %104, %cst_84 [1] : vector<16x32xf32> to vector<16xf32>
    %110 = vector.shape_cast %109 : vector<16xf32> to vector<16x1xf32>
    %cst_85 = arith.constant 3.200000e+01 : f32
    %111 = vector.broadcast %cst_85 : f32 to vector<16x1xf32>
    %112 = arith.divf %110, %111 : vector<16x1xf32>
    %113 = vector.broadcast %112 : vector<16x1xf32> to vector<16x32xf32>
    %114 = arith.subf %104, %113 : vector<16x32xf32>
    %115 = arith.mulf %114, %114 : vector<16x32xf32>
    %cst_86 = arith.constant dense<0.000000e+00> : vector<16xf32>
    %116 = vector.multi_reduction <add>, %115, %cst_86 [1] : vector<16x32xf32> to vector<16xf32>
    %117 = vector.shape_cast %116 : vector<16xf32> to vector<16x1xf32>
    %cst_87 = arith.constant 3.200000e+01 : f32
    %118 = vector.broadcast %cst_87 : f32 to vector<16x1xf32>
    %119 = arith.divf %117, %118 : vector<16x1xf32>
    %120 = vector.broadcast %112 : vector<16x1xf32> to vector<16x32xf32>
    %121 = arith.subf %104, %120 : vector<16x32xf32>
    %cst_88 = arith.constant 9.99999974E-6 : f32
    %122 = vector.broadcast %cst_88 : f32 to vector<16x1xf32>
    %123 = arith.addf %119, %122 : vector<16x1xf32>
    %124 = math.rsqrt %123 : vector<16x1xf32>
    %125 = vector.broadcast %124 : vector<16x1xf32> to vector<16x32xf32>
    %126 = arith.mulf %121, %125 : vector<16x32xf32>
    %127 = vector.broadcast %106 : vector<1x32xf32> to vector<16x32xf32>
    %128 = arith.mulf %126, %127 : vector<16x32xf32>
    %129 = vector.broadcast %108 : vector<1x32xf32> to vector<16x32xf32>
    %130 = arith.addf %128, %129 : vector<16x32xf32>
    %131 = arith.truncf %130 : vector<16x32xf32> to vector<16x32xbf16>
    %c0_89 = arith.constant 0 : index
    %c0_90 = arith.constant 0 : index
    %c0_91 = arith.constant 0 : index
    %132 = vector.load %arg10[%c0_89, %c0_90, %c0_91] : memref<2x32x64xbf16, #tpu.memory_space<vmem>>, vector<1x32x64xbf16>
    %133 = vector.shape_cast %132 : vector<1x32x64xbf16> to vector<32x64xbf16>
    %cst_92 = arith.constant dense<0.000000e+00> : vector<16x64xf32>
    %134 = tpu.matmul %131, %133, %cst_92 {dimension_numbers = #tpu.dot_dimension_numbers<[1], [0], [0], [1], [0, 0, 1, 1], [], []>} : vector<16x32xbf16>, vector<32x64xbf16>, vector<16x64xf32> -> vector<16x64xf32>
    %c0_93 = arith.constant 0 : index
    %c0_94 = arith.constant 0 : index
    %c0_95 = arith.constant 0 : index
    %135 = vector.load %arg11[%c0_93, %c0_94, %c0_95] : memref<2x1x64xf32, #tpu.memory_space<vmem>>, vector<1x1x64xf32>
    %136 = vector.shape_cast %135 : vector<1x1x64xf32> to vector<1x64xf32>
    %137 = vector.broadcast %136 : vector<1x64xf32> to vector<16x64xf32>
    %138 = arith.addf %134, %137 : vector<16x64xf32>
    %cst_96 = arith.constant 0.000000e+00 : f32
    %139 = vector.broadcast %cst_96 : f32 to vector<16x64xf32>
    %140 = arith.maximumf %138, %139 : vector<16x64xf32>
    %141 = arith.truncf %140 : vector<16x64xf32> to vector<16x64xbf16>
    %c0_97 = arith.constant 0 : index
    %c0_98 = arith.constant 0 : index
    %c0_99 = arith.constant 0 : index
    %142 = vector.load %arg12[%c0_97, %c0_98, %c0_99] : memref<2x64x32xbf16, #tpu.memory_space<vmem>>, vector<1x64x32xbf16>
    %143 = vector.shape_cast %142 : vector<1x64x32xbf16> to vector<64x32xbf16>
    %cst_100 = arith.constant dense<0.000000e+00> : vector<16x32xf32>
    %144 = tpu.matmul %141, %143, %cst_100 {dimension_numbers = #tpu.dot_dimension_numbers<[1], [0], [0], [1], [0, 0, 1, 1], [], []>} : vector<16x64xbf16>, vector<64x32xbf16>, vector<16x32xf32> -> vector<16x32xf32>
    %c0_101 = arith.constant 0 : index
    %c0_102 = arith.constant 0 : index
    %c0_103 = arith.constant 0 : index
    %145 = vector.load %arg13[%c0_101, %c0_102, %c0_103] : memref<2x1x32xf32, #tpu.memory_space<vmem>>, vector<1x1x32xf32>
    %146 = vector.shape_cast %145 : vector<1x1x32xf32> to vector<1x32xf32>
    %147 = vector.broadcast %146 : vector<1x32xf32> to vector<16x32xf32>
    %148 = arith.addf %144, %147 : vector<16x32xf32>
    %149 = arith.addf %130, %148 : vector<16x32xf32>
    %c0_104 = arith.constant 0 : index
    %c0_105 = arith.constant 0 : index
    %c0_106 = arith.constant 0 : index
    %150 = vector.load %arg14[%c0_104, %c0_105, %c0_106] : memref<2x1x32xf32, #tpu.memory_space<vmem>>, vector<1x1x32xf32>
    %151 = vector.shape_cast %150 : vector<1x1x32xf32> to vector<1x32xf32>
    %c0_107 = arith.constant 0 : index
    %c0_108 = arith.constant 0 : index
    %c0_109 = arith.constant 0 : index
    %152 = vector.load %arg15[%c0_107, %c0_108, %c0_109] : memref<2x1x32xf32, #tpu.memory_space<vmem>>, vector<1x1x32xf32>
    %153 = vector.shape_cast %152 : vector<1x1x32xf32> to vector<1x32xf32>
    %cst_110 = arith.constant dense<0.000000e+00> : vector<16xf32>
    %154 = vector.multi_reduction <add>, %149, %cst_110 [1] : vector<16x32xf32> to vector<16xf32>
    %155 = vector.shape_cast %154 : vector<16xf32> to vector<16x1xf32>
    %cst_111 = arith.constant 3.200000e+01 : f32
    %156 = vector.broadcast %cst_111 : f32 to vector<16x1xf32>
    %157 = arith.divf %155, %156 : vector<16x1xf32>
    %158 = vector.broadcast %157 : vector<16x1xf32> to vector<16x32xf32>
    %159 = arith.subf %149, %158 : vector<16x32xf32>
    %160 = arith.mulf %159, %159 : vector<16x32xf32>
    %cst_112 = arith.constant dense<0.000000e+00> : vector<16xf32>
    %161 = vector.multi_reduction <add>, %160, %cst_112 [1] : vector<16x32xf32> to vector<16xf32>
    %162 = vector.shape_cast %161 : vector<16xf32> to vector<16x1xf32>
    %cst_113 = arith.constant 3.200000e+01 : f32
    %163 = vector.broadcast %cst_113 : f32 to vector<16x1xf32>
    %164 = arith.divf %162, %163 : vector<16x1xf32>
    %165 = vector.broadcast %157 : vector<16x1xf32> to vector<16x32xf32>
    %166 = arith.subf %149, %165 : vector<16x32xf32>
    %cst_114 = arith.constant 9.99999974E-6 : f32
    %167 = vector.broadcast %cst_114 : f32 to vector<16x1xf32>
    %168 = arith.addf %164, %167 : vector<16x1xf32>
    %169 = math.rsqrt %168 : vector<16x1xf32>
    %170 = vector.broadcast %169 : vector<16x1xf32> to vector<16x32xf32>
    %171 = arith.mulf %166, %170 : vector<16x32xf32>
    %172 = vector.broadcast %151 : vector<1x32xf32> to vector<16x32xf32>
    %173 = arith.mulf %171, %172 : vector<16x32xf32>
    %174 = vector.broadcast %153 : vector<1x32xf32> to vector<16x32xf32>
    %175 = arith.addf %173, %174 : vector<16x32xf32>
    %176 = arith.truncf %175 : vector<16x32xf32> to vector<16x32xbf16>
    %cst_115 = arith.constant 0.000000e+00 : f32
    %177 = vector.broadcast %cst_115 : f32 to vector<16x32xf32>
    %c1_116 = arith.constant 1 : index
    %c0_117 = arith.constant 0 : index
    %c0_118 = arith.constant 0 : index
    %c0_119 = arith.constant 0 : index
    %178 = vector.load %arg2[%c1_116, %c0_117, %c0_118, %c0_119] : memref<2x2x32x16xbf16, #tpu.memory_space<vmem>>, vector<1x1x32x16xbf16>
    %179 = vector.shape_cast %178 : vector<1x1x32x16xbf16> to vector<32x16xbf16>
    %cst_120 = arith.constant dense<0.000000e+00> : vector<16x16xf32>
    %180 = tpu.matmul %176, %179, %cst_120 {dimension_numbers = #tpu.dot_dimension_numbers<[1], [0], [0], [1], [0, 0, 1, 1], [], []>} : vector<16x32xbf16>, vector<32x16xbf16>, vector<16x16xf32> -> vector<16x16xf32>
    %c1_121 = arith.constant 1 : index
    %c0_122 = arith.constant 0 : index
    %c0_123 = arith.constant 0 : index
    %c0_124 = arith.constant 0 : index
    %181 = vector.load %arg3[%c1_121, %c0_122, %c0_123, %c0_124] : memref<2x2x1x16xf32, #tpu.memory_space<vmem>>, vector<1x1x1x16xf32>
    %182 = vector.shape_cast %181 : vector<1x1x1x16xf32> to vector<1x16xf32>
    %183 = vector.broadcast %182 : vector<1x16xf32> to vector<16x16xf32>
    %184 = arith.addf %180, %183 : vector<16x16xf32>
    %c1_125 = arith.constant 1 : index
    %c0_126 = arith.constant 0 : index
    %c0_127 = arith.constant 0 : index
    %c0_128 = arith.constant 0 : index
    %185 = vector.load %arg4[%c1_125, %c0_126, %c0_127, %c0_128] : memref<2x2x32x16xbf16, #tpu.memory_space<vmem>>, vector<1x1x32x16xbf16>
    %186 = vector.shape_cast %185 : vector<1x1x32x16xbf16> to vector<32x16xbf16>
    %cst_129 = arith.constant dense<0.000000e+00> : vector<16x16xf32>
    %187 = tpu.matmul %176, %186, %cst_129 {dimension_numbers = #tpu.dot_dimension_numbers<[1], [0], [0], [1], [0, 0, 1, 1], [], []>} : vector<16x32xbf16>, vector<32x16xbf16>, vector<16x16xf32> -> vector<16x16xf32>
    %c1_130 = arith.constant 1 : index
    %c0_131 = arith.constant 0 : index
    %c0_132 = arith.constant 0 : index
    %c0_133 = arith.constant 0 : index
    %188 = vector.load %arg5[%c1_130, %c0_131, %c0_132, %c0_133] : memref<2x2x1x16xf32, #tpu.memory_space<vmem>>, vector<1x1x1x16xf32>
    %189 = vector.shape_cast %188 : vector<1x1x1x16xf32> to vector<1x16xf32>
    %190 = vector.broadcast %189 : vector<1x16xf32> to vector<16x16xf32>
    %191 = arith.addf %187, %190 : vector<16x16xf32>
    %c1_134 = arith.constant 1 : index
    %c0_135 = arith.constant 0 : index
    %c0_136 = arith.constant 0 : index
    %c0_137 = arith.constant 0 : index
    %192 = vector.load %arg6[%c1_134, %c0_135, %c0_136, %c0_137] : memref<2x2x32x16xbf16, #tpu.memory_space<vmem>>, vector<1x1x32x16xbf16>
    %193 = vector.shape_cast %192 : vector<1x1x32x16xbf16> to vector<32x16xbf16>
    %cst_138 = arith.constant dense<0.000000e+00> : vector<16x16xf32>
    %194 = tpu.matmul %176, %193, %cst_138 {dimension_numbers = #tpu.dot_dimension_numbers<[1], [0], [0], [1], [0, 0, 1, 1], [], []>} : vector<16x32xbf16>, vector<32x16xbf16>, vector<16x16xf32> -> vector<16x16xf32>
    %c1_139 = arith.constant 1 : index
    %c0_140 = arith.constant 0 : index
    %c0_141 = arith.constant 0 : index
    %c0_142 = arith.constant 0 : index
    %195 = vector.load %arg7[%c1_139, %c0_140, %c0_141, %c0_142] : memref<2x2x1x16xf32, #tpu.memory_space<vmem>>, vector<1x1x1x16xf32>
    %196 = vector.shape_cast %195 : vector<1x1x1x16xf32> to vector<1x16xf32>
    %197 = vector.broadcast %196 : vector<1x16xf32> to vector<16x16xf32>
    %198 = arith.addf %194, %197 : vector<16x16xf32>
    %199 = vector.shape_cast %184 : vector<16x16xf32> to vector<2x8x16xf32>
    %200 = arith.truncf %199 : vector<2x8x16xf32> to vector<2x8x16xbf16>
    %201 = vector.shape_cast %191 : vector<16x16xf32> to vector<2x8x16xf32>
    %202 = arith.truncf %201 : vector<2x8x16xf32> to vector<2x8x16xbf16>
    %203 = vector.shape_cast %198 : vector<16x16xf32> to vector<2x8x16xf32>
    %204 = arith.truncf %203 : vector<2x8x16xf32> to vector<2x8x16xbf16>
    "tpu.trace_start"() <{level = 10 : i32, message = "bqd,bkd->bqk"}> : () -> ()
    %cst_143 = arith.constant dense<0.000000e+00> : vector<2x8x8xf32>
    %205 = tpu.matmul %200, %202, %cst_143 {dimension_numbers = #tpu.dot_dimension_numbers<[2], [2], [1], [1], [0, 0, 0, 1, 1, 1], [0], [0]>} : vector<2x8x16xbf16>, vector<2x8x16xbf16>, vector<2x8x8xf32> -> vector<2x8x8xf32>
    "tpu.trace_stop"() : () -> ()
    %cst_144 = arith.constant 0.176776692 : f32
    %206 = vector.broadcast %cst_144 : f32 to vector<2x8x8xf32>
    %207 = arith.mulf %205, %206 : vector<2x8x8xf32>
    %cst_145 = arith.constant dense<0xFF800000> : vector<2x8xf32>
    %208 = vector.multi_reduction <maximumf>, %207, %cst_145 [2] : vector<2x8x8xf32> to vector<2x8xf32>
    %209 = vector.shape_cast %208 : vector<2x8xf32> to vector<2x8x1xf32>
    %210 = vector.broadcast %209 : vector<2x8x1xf32> to vector<2x8x8xf32>
    %211 = arith.subf %207, %210 : vector<2x8x8xf32>
    %212 = math.exp %211 : vector<2x8x8xf32>
    %cst_146 = arith.constant dense<0.000000e+00> : vector<2x8xf32>
    %213 = vector.multi_reduction <add>, %212, %cst_146 [2] : vector<2x8x8xf32> to vector<2x8xf32>
    %214 = vector.shape_cast %213 : vector<2x8xf32> to vector<2x8x1xf32>
    %215 = tpu.reciprocal %214 {approx = true} : vector<2x8x1xf32> -> vector<2x8x1xf32>
    %216 = vector.broadcast %215 : vector<2x8x1xf32> to vector<2x8x8xf32>
    %217 = arith.mulf %212, %216 : vector<2x8x8xf32>
    %218 = arith.truncf %217 : vector<2x8x8xf32> to vector<2x8x8xbf16>
    "tpu.trace_start"() <{level = 10 : i32, message = "bqk,bkd->bqd"}> : () -> ()
    %cst_147 = arith.constant dense<0.000000e+00> : vector<2x8x16xf32>
    %219 = tpu.matmul %218, %204, %cst_147 {dimension_numbers = #tpu.dot_dimension_numbers<[2], [1], [1], [2], [0, 0, 0, 1, 1, 2], [0], [0]>} : vector<2x8x8xbf16>, vector<2x8x16xbf16>, vector<2x8x16xf32> -> vector<2x8x16xf32>
    "tpu.trace_stop"() : () -> ()
    %220 = vector.shape_cast %219 : vector<2x8x16xf32> to vector<16x16xf32>
    %221 = arith.truncf %220 : vector<16x16xf32> to vector<16x16xbf16>
    %c1_148 = arith.constant 1 : index
    %c0_149 = arith.constant 0 : index
    %c0_150 = arith.constant 0 : index
    %c0_151 = arith.constant 0 : index
    %222 = vector.load %arg8[%c1_148, %c0_149, %c0_150, %c0_151] : memref<2x2x16x32xbf16, #tpu.memory_space<vmem>>, vector<1x1x16x32xbf16>
    %223 = vector.shape_cast %222 : vector<1x1x16x32xbf16> to vector<16x32xbf16>
    %cst_152 = arith.constant dense<0.000000e+00> : vector<16x32xf32>
    %224 = tpu.matmul %221, %223, %cst_152 {dimension_numbers = #tpu.dot_dimension_numbers<[1], [0], [0], [1], [0, 0, 1, 1], [], []>} : vector<16x16xbf16>, vector<16x32xbf16>, vector<16x32xf32> -> vector<16x32xf32>
    %225 = arith.addf %177, %224 : vector<16x32xf32>
    %c1_153 = arith.constant 1 : index
    %c1_154 = arith.constant 1 : index
    %c0_155 = arith.constant 0 : index
    %c0_156 = arith.constant 0 : index
    %226 = vector.load %arg2[%c1_153, %c1_154, %c0_155, %c0_156] : memref<2x2x32x16xbf16, #tpu.memory_space<vmem>>, vector<1x1x32x16xbf16>
    %227 = vector.shape_cast %226 : vector<1x1x32x16xbf16> to vector<32x16xbf16>
    %cst_157 = arith.constant dense<0.000000e+00> : vector<16x16xf32>
    %228 = tpu.matmul %176, %227, %cst_157 {dimension_numbers = #tpu.dot_dimension_numbers<[1], [0], [0], [1], [0, 0, 1, 1], [], []>} : vector<16x32xbf16>, vector<32x16xbf16>, vector<16x16xf32> -> vector<16x16xf32>
    %c1_158 = arith.constant 1 : index
    %c1_159 = arith.constant 1 : index
    %c0_160 = arith.constant 0 : index
    %c0_161 = arith.constant 0 : index
    %229 = vector.load %arg3[%c1_158, %c1_159, %c0_160, %c0_161] : memref<2x2x1x16xf32, #tpu.memory_space<vmem>>, vector<1x1x1x16xf32>
    %230 = vector.shape_cast %229 : vector<1x1x1x16xf32> to vector<1x16xf32>
    %231 = vector.broadcast %230 : vector<1x16xf32> to vector<16x16xf32>
    %232 = arith.addf %228, %231 : vector<16x16xf32>
    %c1_162 = arith.constant 1 : index
    %c1_163 = arith.constant 1 : index
    %c0_164 = arith.constant 0 : index
    %c0_165 = arith.constant 0 : index
    %233 = vector.load %arg4[%c1_162, %c1_163, %c0_164, %c0_165] : memref<2x2x32x16xbf16, #tpu.memory_space<vmem>>, vector<1x1x32x16xbf16>
    %234 = vector.shape_cast %233 : vector<1x1x32x16xbf16> to vector<32x16xbf16>
    %cst_166 = arith.constant dense<0.000000e+00> : vector<16x16xf32>
    %235 = tpu.matmul %176, %234, %cst_166 {dimension_numbers = #tpu.dot_dimension_numbers<[1], [0], [0], [1], [0, 0, 1, 1], [], []>} : vector<16x32xbf16>, vector<32x16xbf16>, vector<16x16xf32> -> vector<16x16xf32>
    %c1_167 = arith.constant 1 : index
    %c1_168 = arith.constant 1 : index
    %c0_169 = arith.constant 0 : index
    %c0_170 = arith.constant 0 : index
    %236 = vector.load %arg5[%c1_167, %c1_168, %c0_169, %c0_170] : memref<2x2x1x16xf32, #tpu.memory_space<vmem>>, vector<1x1x1x16xf32>
    %237 = vector.shape_cast %236 : vector<1x1x1x16xf32> to vector<1x16xf32>
    %238 = vector.broadcast %237 : vector<1x16xf32> to vector<16x16xf32>
    %239 = arith.addf %235, %238 : vector<16x16xf32>
    %c1_171 = arith.constant 1 : index
    %c1_172 = arith.constant 1 : index
    %c0_173 = arith.constant 0 : index
    %c0_174 = arith.constant 0 : index
    %240 = vector.load %arg6[%c1_171, %c1_172, %c0_173, %c0_174] : memref<2x2x32x16xbf16, #tpu.memory_space<vmem>>, vector<1x1x32x16xbf16>
    %241 = vector.shape_cast %240 : vector<1x1x32x16xbf16> to vector<32x16xbf16>
    %cst_175 = arith.constant dense<0.000000e+00> : vector<16x16xf32>
    %242 = tpu.matmul %176, %241, %cst_175 {dimension_numbers = #tpu.dot_dimension_numbers<[1], [0], [0], [1], [0, 0, 1, 1], [], []>} : vector<16x32xbf16>, vector<32x16xbf16>, vector<16x16xf32> -> vector<16x16xf32>
    %c1_176 = arith.constant 1 : index
    %c1_177 = arith.constant 1 : index
    %c0_178 = arith.constant 0 : index
    %c0_179 = arith.constant 0 : index
    %243 = vector.load %arg7[%c1_176, %c1_177, %c0_178, %c0_179] : memref<2x2x1x16xf32, #tpu.memory_space<vmem>>, vector<1x1x1x16xf32>
    %244 = vector.shape_cast %243 : vector<1x1x1x16xf32> to vector<1x16xf32>
    %245 = vector.broadcast %244 : vector<1x16xf32> to vector<16x16xf32>
    %246 = arith.addf %242, %245 : vector<16x16xf32>
    %247 = vector.shape_cast %232 : vector<16x16xf32> to vector<2x8x16xf32>
    %248 = arith.truncf %247 : vector<2x8x16xf32> to vector<2x8x16xbf16>
    %249 = vector.shape_cast %239 : vector<16x16xf32> to vector<2x8x16xf32>
    %250 = arith.truncf %249 : vector<2x8x16xf32> to vector<2x8x16xbf16>
    %251 = vector.shape_cast %246 : vector<16x16xf32> to vector<2x8x16xf32>
    %252 = arith.truncf %251 : vector<2x8x16xf32> to vector<2x8x16xbf16>
    "tpu.trace_start"() <{level = 10 : i32, message = "bqd,bkd->bqk"}> : () -> ()
    %cst_180 = arith.constant dense<0.000000e+00> : vector<2x8x8xf32>
    %253 = tpu.matmul %248, %250, %cst_180 {dimension_numbers = #tpu.dot_dimension_numbers<[2], [2], [1], [1], [0, 0, 0, 1, 1, 1], [0], [0]>} : vector<2x8x16xbf16>, vector<2x8x16xbf16>, vector<2x8x8xf32> -> vector<2x8x8xf32>
    "tpu.trace_stop"() : () -> ()
    %cst_181 = arith.constant 0.176776692 : f32
    %254 = vector.broadcast %cst_181 : f32 to vector<2x8x8xf32>
    %255 = arith.mulf %253, %254 : vector<2x8x8xf32>
    %cst_182 = arith.constant dense<0xFF800000> : vector<2x8xf32>
    %256 = vector.multi_reduction <maximumf>, %255, %cst_182 [2] : vector<2x8x8xf32> to vector<2x8xf32>
    %257 = vector.shape_cast %256 : vector<2x8xf32> to vector<2x8x1xf32>
    %258 = vector.broadcast %257 : vector<2x8x1xf32> to vector<2x8x8xf32>
    %259 = arith.subf %255, %258 : vector<2x8x8xf32>
    %260 = math.exp %259 : vector<2x8x8xf32>
    %cst_183 = arith.constant dense<0.000000e+00> : vector<2x8xf32>
    %261 = vector.multi_reduction <add>, %260, %cst_183 [2] : vector<2x8x8xf32> to vector<2x8xf32>
    %262 = vector.shape_cast %261 : vector<2x8xf32> to vector<2x8x1xf32>
    %263 = tpu.reciprocal %262 {approx = true} : vector<2x8x1xf32> -> vector<2x8x1xf32>
    %264 = vector.broadcast %263 : vector<2x8x1xf32> to vector<2x8x8xf32>
    %265 = arith.mulf %260, %264 : vector<2x8x8xf32>
    %266 = arith.truncf %265 : vector<2x8x8xf32> to vector<2x8x8xbf16>
    "tpu.trace_start"() <{level = 10 : i32, message = "bqk,bkd->bqd"}> : () -> ()
    %cst_184 = arith.constant dense<0.000000e+00> : vector<2x8x16xf32>
    %267 = tpu.matmul %266, %252, %cst_184 {dimension_numbers = #tpu.dot_dimension_numbers<[2], [1], [1], [2], [0, 0, 0, 1, 1, 2], [0], [0]>} : vector<2x8x8xbf16>, vector<2x8x16xbf16>, vector<2x8x16xf32> -> vector<2x8x16xf32>
    "tpu.trace_stop"() : () -> ()
    %268 = vector.shape_cast %267 : vector<2x8x16xf32> to vector<16x16xf32>
    %269 = arith.truncf %268 : vector<16x16xf32> to vector<16x16xbf16>
    %c1_185 = arith.constant 1 : index
    %c1_186 = arith.constant 1 : index
    %c0_187 = arith.constant 0 : index
    %c0_188 = arith.constant 0 : index
    %270 = vector.load %arg8[%c1_185, %c1_186, %c0_187, %c0_188] : memref<2x2x16x32xbf16, #tpu.memory_space<vmem>>, vector<1x1x16x32xbf16>
    %271 = vector.shape_cast %270 : vector<1x1x16x32xbf16> to vector<16x32xbf16>
    %cst_189 = arith.constant dense<0.000000e+00> : vector<16x32xf32>
    %272 = tpu.matmul %269, %271, %cst_189 {dimension_numbers = #tpu.dot_dimension_numbers<[1], [0], [0], [1], [0, 0, 1, 1], [], []>} : vector<16x16xbf16>, vector<16x32xbf16>, vector<16x32xf32> -> vector<16x32xf32>
    %273 = arith.addf %225, %272 : vector<16x32xf32>
    %c1_190 = arith.constant 1 : index
    %c0_191 = arith.constant 0 : index
    %c0_192 = arith.constant 0 : index
    %274 = vector.load %arg9[%c1_190, %c0_191, %c0_192] : memref<2x1x32xf32, #tpu.memory_space<vmem>>, vector<1x1x32xf32>
    %275 = vector.shape_cast %274 : vector<1x1x32xf32> to vector<1x32xf32>
    %276 = vector.broadcast %275 : vector<1x32xf32> to vector<16x32xf32>
    %277 = arith.addf %273, %276 : vector<16x32xf32>
    %278 = arith.addf %277, %175 : vector<16x32xf32>
    %c1_193 = arith.constant 1 : index
    %c0_194 = arith.constant 0 : index
    %c0_195 = arith.constant 0 : index
    %279 = vector.load %arg14[%c1_193, %c0_194, %c0_195] : memref<2x1x32xf32, #tpu.memory_space<vmem>>, vector<1x1x32xf32>
    %280 = vector.shape_cast %279 : vector<1x1x32xf32> to vector<1x32xf32>
    %c1_196 = arith.constant 1 : index
    %c0_197 = arith.constant 0 : index
    %c0_198 = arith.constant 0 : index
    %281 = vector.load %arg15[%c1_196, %c0_197, %c0_198] : memref<2x1x32xf32, #tpu.memory_space<vmem>>, vector<1x1x32xf32>
    %282 = vector.shape_cast %281 : vector<1x1x32xf32> to vector<1x32xf32>
    %cst_199 = arith.constant dense<0.000000e+00> : vector<16xf32>
    %283 = vector.multi_reduction <add>, %278, %cst_199 [1] : vector<16x32xf32> to vector<16xf32>
    %284 = vector.shape_cast %283 : vector<16xf32> to vector<16x1xf32>
    %cst_200 = arith.constant 3.200000e+01 : f32
    %285 = vector.broadcast %cst_200 : f32 to vector<16x1xf32>
    %286 = arith.divf %284, %285 : vector<16x1xf32>
    %287 = vector.broadcast %286 : vector<16x1xf32> to vector<16x32xf32>
    %288 = arith.subf %278, %287 : vector<16x32xf32>
    %289 = arith.mulf %288, %288 : vector<16x32xf32>
    %cst_201 = arith.constant dense<0.000000e+00> : vector<16xf32>
    %290 = vector.multi_reduction <add>, %289, %cst_201 [1] : vector<16x32xf32> to vector<16xf32>
    %291 = vector.shape_cast %290 : vector<16xf32> to vector<16x1xf32>
    %cst_202 = arith.constant 3.200000e+01 : f32
    %292 = vector.broadcast %cst_202 : f32 to vector<16x1xf32>
    %293 = arith.divf %291, %292 : vector<16x1xf32>
    %294 = vector.broadcast %286 : vector<16x1xf32> to vector<16x32xf32>
    %295 = arith.subf %278, %294 : vector<16x32xf32>
    %cst_203 = arith.constant 9.99999974E-6 : f32
    %296 = vector.broadcast %cst_203 : f32 to vector<16x1xf32>
    %297 = arith.addf %293, %296 : vector<16x1xf32>
    %298 = math.rsqrt %297 : vector<16x1xf32>
    %299 = vector.broadcast %298 : vector<16x1xf32> to vector<16x32xf32>
    %300 = arith.mulf %295, %299 : vector<16x32xf32>
    %301 = vector.broadcast %280 : vector<1x32xf32> to vector<16x32xf32>
    %302 = arith.mulf %300, %301 : vector<16x32xf32>
    %303 = vector.broadcast %282 : vector<1x32xf32> to vector<16x32xf32>
    %304 = arith.addf %302, %303 : vector<16x32xf32>
    %305 = arith.truncf %304 : vector<16x32xf32> to vector<16x32xbf16>
    %c1_204 = arith.constant 1 : index
    %c0_205 = arith.constant 0 : index
    %c0_206 = arith.constant 0 : index
    %306 = vector.load %arg10[%c1_204, %c0_205, %c0_206] : memref<2x32x64xbf16, #tpu.memory_space<vmem>>, vector<1x32x64xbf16>
    %307 = vector.shape_cast %306 : vector<1x32x64xbf16> to vector<32x64xbf16>
    %cst_207 = arith.constant dense<0.000000e+00> : vector<16x64xf32>
    %308 = tpu.matmul %305, %307, %cst_207 {dimension_numbers = #tpu.dot_dimension_numbers<[1], [0], [0], [1], [0, 0, 1, 1], [], []>} : vector<16x32xbf16>, vector<32x64xbf16>, vector<16x64xf32> -> vector<16x64xf32>
    %c1_208 = arith.constant 1 : index
    %c0_209 = arith.constant 0 : index
    %c0_210 = arith.constant 0 : index
    %309 = vector.load %arg11[%c1_208, %c0_209, %c0_210] : memref<2x1x64xf32, #tpu.memory_space<vmem>>, vector<1x1x64xf32>
    %310 = vector.shape_cast %309 : vector<1x1x64xf32> to vector<1x64xf32>
    %311 = vector.broadcast %310 : vector<1x64xf32> to vector<16x64xf32>
    %312 = arith.addf %308, %311 : vector<16x64xf32>
    %cst_211 = arith.constant 0.000000e+00 : f32
    %313 = vector.broadcast %cst_211 : f32 to vector<16x64xf32>
    %314 = arith.maximumf %312, %313 : vector<16x64xf32>
    %315 = arith.truncf %314 : vector<16x64xf32> to vector<16x64xbf16>
    %c1_212 = arith.constant 1 : index
    %c0_213 = arith.constant 0 : index
    %c0_214 = arith.constant 0 : index
    %316 = vector.load %arg12[%c1_212, %c0_213, %c0_214] : memref<2x64x32xbf16, #tpu.memory_space<vmem>>, vector<1x64x32xbf16>
    %317 = vector.shape_cast %316 : vector<1x64x32xbf16> to vector<64x32xbf16>
    %cst_215 = arith.constant dense<0.000000e+00> : vector<16x32xf32>
    %318 = tpu.matmul %315, %317, %cst_215 {dimension_numbers = #tpu.dot_dimension_numbers<[1], [0], [0], [1], [0, 0, 1, 1], [], []>} : vector<16x64xbf16>, vector<64x32xbf16>, vector<16x32xf32> -> vector<16x32xf32>
    %c1_216 = arith.constant 1 : index
    %c0_217 = arith.constant 0 : index
    %c0_218 = arith.constant 0 : index
    %319 = vector.load %arg13[%c1_216, %c0_217, %c0_218] : memref<2x1x32xf32, #tpu.memory_space<vmem>>, vector<1x1x32xf32>
    %320 = vector.shape_cast %319 : vector<1x1x32xf32> to vector<1x32xf32>
    %321 = vector.broadcast %320 : vector<1x32xf32> to vector<16x32xf32>
    %322 = arith.addf %318, %321 : vector<16x32xf32>
    %323 = arith.addf %304, %322 : vector<16x32xf32>
    %c1_219 = arith.constant 1 : index
    %c0_220 = arith.constant 0 : index
    %c0_221 = arith.constant 0 : index
    %324 = vector.load %arg14[%c1_219, %c0_220, %c0_221] : memref<2x1x32xf32, #tpu.memory_space<vmem>>, vector<1x1x32xf32>
    %325 = vector.shape_cast %324 : vector<1x1x32xf32> to vector<1x32xf32>
    %c1_222 = arith.constant 1 : index
    %c0_223 = arith.constant 0 : index
    %c0_224 = arith.constant 0 : index
    %326 = vector.load %arg15[%c1_222, %c0_223, %c0_224] : memref<2x1x32xf32, #tpu.memory_space<vmem>>, vector<1x1x32xf32>
    %327 = vector.shape_cast %326 : vector<1x1x32xf32> to vector<1x32xf32>
    %cst_225 = arith.constant dense<0.000000e+00> : vector<16xf32>
    %328 = vector.multi_reduction <add>, %323, %cst_225 [1] : vector<16x32xf32> to vector<16xf32>
    %329 = vector.shape_cast %328 : vector<16xf32> to vector<16x1xf32>
    %cst_226 = arith.constant 3.200000e+01 : f32
    %330 = vector.broadcast %cst_226 : f32 to vector<16x1xf32>
    %331 = arith.divf %329, %330 : vector<16x1xf32>
    %332 = vector.broadcast %331 : vector<16x1xf32> to vector<16x32xf32>
    %333 = arith.subf %323, %332 : vector<16x32xf32>
    %334 = arith.mulf %333, %333 : vector<16x32xf32>
    %cst_227 = arith.constant dense<0.000000e+00> : vector<16xf32>
    %335 = vector.multi_reduction <add>, %334, %cst_227 [1] : vector<16x32xf32> to vector<16xf32>
    %336 = vector.shape_cast %335 : vector<16xf32> to vector<16x1xf32>
    %cst_228 = arith.constant 3.200000e+01 : f32
    %337 = vector.broadcast %cst_228 : f32 to vector<16x1xf32>
    %338 = arith.divf %336, %337 : vector<16x1xf32>
    %339 = vector.broadcast %331 : vector<16x1xf32> to vector<16x32xf32>
    %340 = arith.subf %323, %339 : vector<16x32xf32>
    %cst_229 = arith.constant 9.99999974E-6 : f32
    %341 = vector.broadcast %cst_229 : f32 to vector<16x1xf32>
    %342 = arith.addf %338, %341 : vector<16x1xf32>
    %343 = math.rsqrt %342 : vector<16x1xf32>
    %344 = vector.broadcast %343 : vector<16x1xf32> to vector<16x32xf32>
    %345 = arith.mulf %340, %344 : vector<16x32xf32>
    %346 = vector.broadcast %325 : vector<1x32xf32> to vector<16x32xf32>
    %347 = arith.mulf %345, %346 : vector<16x32xf32>
    %348 = vector.broadcast %327 : vector<1x32xf32> to vector<16x32xf32>
    %349 = arith.addf %347, %348 : vector<16x32xf32>
    %350 = vector.shape_cast %349 : vector<16x32xf32> to vector<2x8x32xf32>
    %c0_230 = arith.constant 0 : index
    %c0_231 = arith.constant 0 : index
    %c0_232 = arith.constant 0 : index
    %351 = vector.load %arg16[%c0_230, %c0_231, %c0_232] : memref<2x8x32xf32, #tpu.memory_space<vmem>>, vector<2x8x32xf32>
    tpu.vector_store %arg16[%c0_230, %c0_231, %c0_232], %350 {strides = array<i32>} : memref<2x8x32xf32, #tpu.memory_space<vmem>>, vector<2x8x32xf32>,
    return
  }
  func.func @transform_0(%arg0: i32) -> (i32, i32, i32) {
    %c0_i32 = arith.constant 0 : i32
    %c0_i32_0 = arith.constant 0 : i32
    %c0_i32_1 = arith.constant 0 : i32
    return %arg0, %c0_i32, %c0_i32_0 : i32, i32, i32
  }
  func.func @transform_1(%arg0: i32) -> (i32, i32, i32, i32) {
    %c0_i32 = arith.constant 0 : i32
    %c0_i32_0 = arith.constant 0 : i32
    %c0_i32_1 = arith.constant 0 : i32
    %c0_i32_2 = arith.constant 0 : i32
    %c0_i32_3 = arith.constant 0 : i32
    return %c0_i32, %c0_i32_0, %c0_i32_1, %c0_i32_2 : i32, i32, i32, i32
  }
  func.func @transform_2(%arg0: i32) -> (i32, i32, i32, i32) {
    %c0_i32 = arith.constant 0 : i32
    %c0_i32_0 = arith.constant 0 : i32
    %c0_i32_1 = arith.constant 0 : i32
    %c0_i32_2 = arith.constant 0 : i32
    %c0_i32_3 = arith.constant 0 : i32
    return %c0_i32, %c0_i32_0, %c0_i32_1, %c0_i32_2 : i32, i32, i32, i32
  }
  func.func @transform_3(%arg0: i32) -> (i32, i32, i32, i32) {
    %c0_i32 = arith.constant 0 : i32
    %c0_i32_0 = arith.constant 0 : i32
    %c0_i32_1 = arith.constant 0 : i32
    %c0_i32_2 = arith.constant 0 : i32
    %c0_i32_3 = arith.constant 0 : i32
    return %c0_i32, %c0_i32_0, %c0_i32_1, %c0_i32_2 : i32, i32, i32, i32
  }
  func.func @transform_4(%arg0: i32) -> (i32, i32, i32, i32) {
    %c0_i32 = arith.constant 0 : i32
    %c0_i32_0 = arith.constant 0 : i32
    %c0_i32_1 = arith.constant 0 : i32
    %c0_i32_2 = arith.constant 0 : i32
    %c0_i32_3 = arith.constant 0 : i32
    return %c0_i32, %c0_i32_0, %c0_i32_1, %c0_i32_2 : i32, i32, i32, i32
  }
  func.func @transform_5(%arg0: i32) -> (i32, i32, i32, i32) {
    %c0_i32 = arith.constant 0 : i32
    %c0_i32_0 = arith.constant 0 : i32
    %c0_i32_1 = arith.constant 0 : i32
    %c0_i32_2 = arith.constant 0 : i32
    %c0_i32_3 = arith.constant 0 : i32
    return %c0_i32, %c0_i32_0, %c0_i32_1, %c0_i32_2 : i32, i32, i32, i32
  }
  func.func @transform_6(%arg0: i32) -> (i32, i32, i32, i32) {
    %c0_i32 = arith.constant 0 : i32
    %c0_i32_0 = arith.constant 0 : i32
    %c0_i32_1 = arith.constant 0 : i32
    %c0_i32_2 = arith.constant 0 : i32
    %c0_i32_3 = arith.constant 0 : i32
    return %c0_i32, %c0_i32_0, %c0_i32_1, %c0_i32_2 : i32, i32, i32, i32
  }
  func.func @transform_7(%arg0: i32) -> (i32, i32, i32, i32) {
    %c0_i32 = arith.constant 0 : i32
    %c0_i32_0 = arith.constant 0 : i32
    %c0_i32_1 = arith.constant 0 : i32
    %c0_i32_2 = arith.constant 0 : i32
    %c0_i32_3 = arith.constant 0 : i32
    return %c0_i32, %c0_i32_0, %c0_i32_1, %c0_i32_2 : i32, i32, i32, i32
  }
  func.func @transform_8(%arg0: i32) -> (i32, i32, i32) {
    %c0_i32 = arith.constant 0 : i32
    %c0_i32_0 = arith.constant 0 : i32
    %c0_i32_1 = arith.constant 0 : i32
    %c0_i32_2 = arith.constant 0 : i32
    return %c0_i32, %c0_i32_0, %c0_i32_1 : i32, i32, i32
  }
  func.func @transform_9(%arg0: i32) -> (i32, i32, i32) {
    %c0_i32 = arith.constant 0 : i32
    %c0_i32_0 = arith.constant 0 : i32
    %c0_i32_1 = arith.constant 0 : i32
    %c0_i32_2 = arith.constant 0 : i32
    return %c0_i32, %c0_i32_0, %c0_i32_1 : i32, i32, i32
  }
  func.func @transform_10(%arg0: i32) -> (i32, i32, i32) {
    %c0_i32 = arith.constant 0 : i32
    %c0_i32_0 = arith.constant 0 : i32
    %c0_i32_1 = arith.constant 0 : i32
    %c0_i32_2 = arith.constant 0 : i32
    return %c0_i32, %c0_i32_0, %c0_i32_1 : i32, i32, i32
  }
  func.func @transform_11(%arg0: i32) -> (i32, i32, i32) {
    %c0_i32 = arith.constant 0 : i32
    %c0_i32_0 = arith.constant 0 : i32
    %c0_i32_1 = arith.constant 0 : i32
    %c0_i32_2 = arith.constant 0 : i32
    return %c0_i32, %c0_i32_0, %c0_i32_1 : i32, i32, i32
  }
  func.func @transform_12(%arg0: i32) -> (i32, i32, i32) {
    %c0_i32 = arith.constant 0 : i32
    %c0_i32_0 = arith.constant 0 : i32
    %c0_i32_1 = arith.constant 0 : i32
    %c0_i32_2 = arith.constant 0 : i32
    return %c0_i32, %c0_i32_0, %c0_i32_1 : i32, i32, i32
  }
  func.func @transform_13(%arg0: i32) -> (i32, i32, i32) {
    %c0_i32 = arith.constant 0 : i32
    %c0_i32_0 = arith.constant 0 : i32
    %c0_i32_1 = arith.constant 0 : i32
    %c0_i32_2 = arith.constant 0 : i32
    return %c0_i32, %c0_i32_0, %c0_i32_1 : i32, i32, i32
  }
  func.func @transform_14(%arg0: i32) -> (i32, i32, i32) {
    %c0_i32 = arith.constant 0 : i32
    %c0_i32_0 = arith.constant 0 : i32
    %c0_i32_1 = arith.constant 0 : i32
    %c0_i32_2 = arith.constant 0 : i32
    return %c0_i32, %c0_i32_0, %c0_i32_1 : i32, i32, i32
  }
  func.func @transform_15(%arg0: i32) -> (i32, i32, i32) {
    %c0_i32 = arith.constant 0 : i32
    %c0_i32_0 = arith.constant 0 : i32
    %c0_i32_1 = arith.constant 0 : i32
    return %arg0, %c0_i32, %c0_i32_0 : i32, i32, i32
  }
}

</mosaic_0001>

<llo_original>
// kernel: tpu_custom_call.1
$region0: #{tpu_custom_call.1}
  #allocation0 [shape = 'u32[]', space=smem, size = 0x4, offset = 0x4, fixed_abs, tag = 'smem constant byte address 0x4 - core index']
  #allocation1 [shape = 'u32[72,128]{1,0:T(1,128)}', space=vmem, size = 0x9000, scoped, tag = 'internal scratch']
  %s0 = inlined_call_operand.vmem [shape: f32[2,8,32], index: 0, kind: input, shape index: {}]
  %s1 = inlined_call_operand.vmem [shape: bf16[2,2,32,16], index: 1, kind: input, shape index: {}]
  %s2 = inlined_call_operand.vmem [shape: f32[2,2,1,16], index: 2, kind: input, shape index: {}]
  %s3 = inlined_call_operand.vmem [shape: bf16[2,2,32,16], index: 3, kind: input, shape index: {}]
  %s4 = inlined_call_operand.vmem [shape: f32[2,2,1,16], index: 4, kind: input, shape index: {}]
  %s5 = inlined_call_operand.vmem [shape: bf16[2,2,32,16], index: 5, kind: input, shape index: {}]
  %s6 = inlined_call_operand.vmem [shape: f32[2,2,1,16], index: 6, kind: input, shape index: {}]
  %s7 = inlined_call_operand.vmem [shape: bf16[2,2,16,32], index: 7, kind: input, shape index: {}]
  %s8 = inlined_call_operand.vmem [shape: f32[2,1,32], index: 8, kind: input, shape index: {}]
  %s9 = inlined_call_operand.vmem [shape: bf16[2,32,64], index: 9, kind: input, shape index: {}]
  %s10 = inlined_call_operand.vmem [shape: f32[2,1,64], index: 10, kind: input, shape index: {}]
  %s11 = inlined_call_operand.vmem [shape: bf16[2,64,32], index: 11, kind: input, shape index: {}]
  %s12 = inlined_call_operand.vmem [shape: f32[2,1,32], index: 12, kind: input, shape index: {}]
  %s13 = inlined_call_operand.vmem [shape: f32[2,1,32], index: 13, kind: input, shape index: {}]
  %s14 = inlined_call_operand.vmem [shape: f32[2,1,32], index: 14, kind: input, shape index: {}]
  %s15 = inlined_call_operand.hbm [shape: f32[2,8,32], index: 15, kind: output, shape index: {}]
  %s16 = sld [smem:[#allocation0]]
  $region70: #{tpu_custom_call.1} parent=0
    _
  %s18 = ssub.s32 1, %s16
  %s19 = scalar_select 0, %s18, %s16
  $region1: #{tpu_custom_call.1} parent=0
    #allocation2 [shape = 'u8[8192]{0}', space=vmem, size = 0x2000, scoped, tag = 'output window, operand 0, single buffered']
    #allocation3 [shape = 's32[1]{0}', space=sflag, size = 0x4, scoped, tag = 'scoped memory for tpu_custom_call.1']
    %20 = vsyncpa [#allocation3], 0
    // Predicated region
    $region2: #{tpu_custom_call.1} parent=1 // pred_check
      _
    $region3: #{tpu_custom_call.1} parent=1 // pred_check_branch
      %22 = sbr.rel (0) target = $region5
    $region4: #{tpu_custom_call.1} parent=1 // pred_region
      _
    $region5: #{tpu_custom_call.1} parent=1 // pred_fallthru
      _
    // Predicated region
    $region6: #{tpu_custom_call.1} parent=1 // pred_check
      _
    $region7: #{tpu_custom_call.1} parent=1 // pred_check_branch
      %24 = sbr.rel (0) target = $region9
    $region8: #{tpu_custom_call.1} parent=1 // pred_region
      _
    $region9: #{tpu_custom_call.1} parent=1 // pred_fallthru
      _
    // Predicated region
    $region10: #{tpu_custom_call.1} parent=1 // pred_check
      _
    $region11: #{tpu_custom_call.1} parent=1 // pred_check_branch
      %26 = sbr.rel (0) target = $region13
    $region12: #{tpu_custom_call.1} parent=1 // pred_region
      _
    $region13: #{tpu_custom_call.1} parent=1 // pred_fallthru
      _
    // Predicated region
    $region14: #{tpu_custom_call.1} parent=1 // pred_check
      _
    $region15: #{tpu_custom_call.1} parent=1 // pred_check_branch
      %28 = sbr.rel (0) target = $region17
    $region16: #{tpu_custom_call.1} parent=1 // pred_region
      _
    $region17: #{tpu_custom_call.1} parent=1 // pred_fallthru
      _
    // Predicated region
    $region18: #{tpu_custom_call.1} parent=1 // pred_check
      _
    $region19: #{tpu_custom_call.1} parent=1 // pred_check_branch
      %30 = sbr.rel (0) target = $region21
    $region20: #{tpu_custom_call.1} parent=1 // pred_region
      _
    $region21: #{tpu_custom_call.1} parent=1 // pred_fallthru
      _
    // Predicated region
    $region22: #{tpu_custom_call.1} parent=1 // pred_check
      _
    $region23: #{tpu_custom_call.1} parent=1 // pred_check_branch
      %32 = sbr.rel (0) target = $region25
    $region24: #{tpu_custom_call.1} parent=1 // pred_region
      _
    $region25: #{tpu_custom_call.1} parent=1 // pred_fallthru
      _
    // Predicated region
    $region26: #{tpu_custom_call.1} parent=1 // pred_check
      _
    $region27: #{tpu_custom_call.1} parent=1 // pred_check_branch
      %34 = sbr.rel (0) target = $region29
    $region28: #{tpu_custom_call.1} parent=1 // pred_region
      _
    $region29: #{tpu_custom_call.1} parent=1 // pred_fallthru
      _
    // Predicated region
    $region30: #{tpu_custom_call.1} parent=1 // pred_check
      _
    $region31: #{tpu_custom_call.1} parent=1 // pred_check_branch
      %36 = sbr.rel (0) target = $region33
    $region32: #{tpu_custom_call.1} parent=1 // pred_region
      _
    $region33: #{tpu_custom_call.1} parent=1 // pred_fallthru
      _
    // Predicated region
    $region34: #{tpu_custom_call.1} parent=1 // pred_check
      _
    $region35: #{tpu_custom_call.1} parent=1 // pred_check_branch
      %38 = sbr.rel (0) target = $region37
    $region36: #{tpu_custom_call.1} parent=1 // pred_region
      _
    $region37: #{tpu_custom_call.1} parent=1 // pred_fallthru
      _
    // Predicated region
    $region38: #{tpu_custom_call.1} parent=1 // pred_check
      _
    $region39: #{tpu_custom_call.1} parent=1 // pred_check_branch
      %40 = sbr.rel (0) target = $region41
    $region40: #{tpu_custom_call.1} parent=1 // pred_region
      _
    $region41: #{tpu_custom_call.1} parent=1 // pred_fallthru
      _
    // Predicated region
    $region42: #{tpu_custom_call.1} parent=1 // pred_check
      _
    $region43: #{tpu_custom_call.1} parent=1 // pred_check_branch
      %42 = sbr.rel (0) target = $region45
    $region44: #{tpu_custom_call.1} parent=1 // pred_region
      _
    $region45: #{tpu_custom_call.1} parent=1 // pred_fallthru
      _
    // Predicated region
    $region46: #{tpu_custom_call.1} parent=1 // pred_check
      _
    $region47: #{tpu_custom_call.1} parent=1 // pred_check_branch
      %44 = sbr.rel (0) target = $region49
    $region48: #{tpu_custom_call.1} parent=1 // pred_region
      _
    $region49: #{tpu_custom_call.1} parent=1 // pred_fallthru
      _
    // Predicated region
    $region50: #{tpu_custom_call.1} parent=1 // pred_check
      _
    $region51: #{tpu_custom_call.1} parent=1 // pred_check_branch
      %46 = sbr.rel (0) target = $region53
    $region52: #{tpu_custom_call.1} parent=1 // pred_region
      _
    $region53: #{tpu_custom_call.1} parent=1 // pred_fallthru
      _
    // Predicated region
    $region54: #{tpu_custom_call.1} parent=1 // pred_check
      _
    $region55: #{tpu_custom_call.1} parent=1 // pred_check_branch
      %48 = sbr.rel (0) target = $region57
    $region56: #{tpu_custom_call.1} parent=1 // pred_region
      _
    $region57: #{tpu_custom_call.1} parent=1 // pred_fallthru
      _
    // Predicated region
    $region58: #{tpu_custom_call.1} parent=1 // pred_check
      _
    $region59: #{tpu_custom_call.1} parent=1 // pred_check_branch
      %50 = sbr.rel (0) target = $region61
    $region60: #{tpu_custom_call.1} parent=1 // pred_region
      _
    $region61: #{tpu_custom_call.1} parent=1 // pred_fallthru
      _
    %v52 = vld [vmem:[%s0] sm:$0xff]
    %v53 = vld [vmem:[%s0 + $0x8] sm:$0xff]
    %v54 = vpack.c.bf16 %v53, %v52
    %v55 = vld [vmem:[%s1] sm:$0xf]
    %v56 = vld [vmem:[%s1 + $0x4] sm:$0xf]
    %v57 = vld [vmem:[%s1 + $0x8] sm:$0xf]
    %v58 = vld [vmem:[%s1 + $0xc] sm:$0xf]
    %v59 = vld [vmem:[%s2] sm:$0x1]
    %v61 = vperm.slane %v59, 0
    %v67 = vunpack.c.l.b16 %v55
    %v68 = vunpack.c.l.b16 %v56
    %v69 = vunpack.c.l.b16 %v57
    %v70 = vunpack.c.l.b16 %v58
    %v71 = vpack.c.b16 %v68, %v67
    %v72 = vpack.c.b16 %v70, %v69
    %vm75 = vcmask 261120
    %v77 = vsel %vm75, %v54, 0
    %79 = vmatpush.bf16.msra.mxu0 0
    %80 = vmatpush.bf16.msra.mxu0 0
    %81 = vmatpush.bf16.msra.mxu0 0
    %82 = vmatpush.bf16.msra.mxu0 0
    %83 = vmatpush.bf16.msra.mxu0 0
    %84 = vmatpush.bf16.msra.mxu0 0
    %85 = vmatpush.bf16.msra.mxu0 %v72
    %86 = vmatpush.bf16.msra.mxu0 %v71
    %87 = vmatmul.bf16.gmra.mxu0 %v77
    %v88 = vpop.f32.mrf.mxu0
    %v89 = vadd.f32 %v61, %v88
    %v90 = vpop.f32.mrf.mxu0
    %v91 = vadd.f32 %v61, %v90
    %92 = vdwg.mxu0
    %v93 = vld [vmem:[%s3] sm:$0xf]
    %v94 = vld [vmem:[%s3 + $0x4] sm:$0xf]
    %v95 = vld [vmem:[%s3 + $0x8] sm:$0xf]
    %v96 = vld [vmem:[%s3 + $0xc] sm:$0xf]
    %v97 = vld [vmem:[%s4] sm:$0x1]
    %v99 = vperm.slane %v97, 0
    %v105 = vunpack.c.l.b16 %v93
    %v106 = vunpack.c.l.b16 %v94
    %v107 = vunpack.c.l.b16 %v95
    %v108 = vunpack.c.l.b16 %v96
    %v109 = vpack.c.b16 %v106, %v105
    %v110 = vpack.c.b16 %v108, %v107
    %113 = vmatpush.bf16.msra.mxu0 0
    %114 = vmatpush.bf16.msra.mxu0 0
    %115 = vmatpush.bf16.msra.mxu0 0
    %116 = vmatpush.bf16.msra.mxu0 0
    %117 = vmatpush.bf16.msra.mxu0 0
    %118 = vmatpush.bf16.msra.mxu0 0
    %119 = vmatpush.bf16.msra.mxu0 %v110
    %120 = vmatpush.bf16.msra.mxu0 %v109
    %121 = vmatmul.bf16.gmra.mxu0 %v77
    %v122 = vpop.f32.mrf.mxu0
    %v123 = vadd.f32 %v99, %v122
    %v124 = vpop.f32.mrf.mxu0
    %v125 = vadd.f32 %v99, %v124
    %126 = vdwg.mxu0
    %v127 = vld [vmem:[%s5] sm:$0xf]
    %v128 = vld [vmem:[%s5 + $0x4] sm:$0xf]
    %v129 = vld [vmem:[%s5 + $0x8] sm:$0xf]
    %v130 = vld [vmem:[%s5 + $0xc] sm:$0xf]
    %v131 = vld [vmem:[%s6] sm:$0x1]
    %v133 = vperm.slane %v131, 0
    %v139 = vunpack.c.l.b16 %v127
    %v140 = vunpack.c.l.b16 %v128
    %v141 = vunpack.c.l.b16 %v129
    %v142 = vunpack.c.l.b16 %v130
    %v143 = vpack.c.b16 %v140, %v139
    %v144 = vpack.c.b16 %v142, %v141
    %147 = vmatpush.bf16.msra.mxu0 0
    %148 = vmatpush.bf16.msra.mxu0 0
    %149 = vmatpush.bf16.msra.mxu0 0
    %150 = vmatpush.bf16.msra.mxu0 0
    %151 = vmatpush.bf16.msra.mxu0 0
    %152 = vmatpush.bf16.msra.mxu0 0
    %153 = vmatpush.bf16.msra.mxu0 %v144
    %154 = vmatpush.bf16.msra.mxu0 %v143
    %155 = vmatmul.bf16.gmra.mxu0 %v77
    %v156 = vpop.f32.mrf.mxu0
    %v157 = vadd.f32 %v133, %v156
    %v158 = vpop.f32.mrf.mxu0
    %v159 = vadd.f32 %v133, %v158
    %160 = vdwg.mxu0
    %v161 = vpack.c.bf16 %v89, %v89
    %v162 = vpack.c.bf16 %v91, %v91
    %v163 = vpack.c.bf16 %v123, %v123
    %v164 = vpack.c.bf16 %v125, %v125
    %v165 = vpack.c.bf16 %v157, %v157
    %v166 = vpack.c.bf16 %v159, %v159
    %vm167 = vcmask 130048
    %v169 = vsel %vm167, %v161, 0
    %v172 = vsel %vm167, %v163, 0
    %174 = vmatpush.bf16.xpose.msra.mxu0 0
    %175 = vmatpush.bf16.xpose.msra.mxu0 0
    %176 = vmatpush.bf16.xpose.msra.mxu0 0
    %177 = vmatpush.bf16.xpose.msra.mxu0 0
    %178 = vmatpush.bf16.xpose.msra.mxu0 0
    %179 = vmatpush.bf16.xpose.msra.mxu0 0
    %180 = vmatpush.bf16.xpose.msra.mxu0 0
    %181 = vmatpush.bf16.xpose.msra.mxu0 %v172
    %182 = vmatmul.bf16.gmra.mxu0 %v169
    %v183 = vpop.f32.mrf.mxu0
    %v184 = vadd.f32 0.0, %v183
    %v185 = vpop.f32.mrf.mxu0
    %186 = vdwg.mxu0
    %v188 = vsel %vm167, %v162, 0
    %v191 = vsel %vm167, %v164, 0
    %193 = vmatpush.bf16.xpose.msra.mxu0 0
    %194 = vmatpush.bf16.xpose.msra.mxu0 0
    %195 = vmatpush.bf16.xpose.msra.mxu0 0
    %196 = vmatpush.bf16.xpose.msra.mxu0 0
    %197 = vmatpush.bf16.xpose.msra.mxu0 0
    %198 = vmatpush.bf16.xpose.msra.mxu0 0
    %199 = vmatpush.bf16.xpose.msra.mxu0 0
    %200 = vmatpush.bf16.xpose.msra.mxu0 %v191
    %201 = vmatmul.bf16.gmra.mxu0 %v188
    %v202 = vpop.f32.mrf.mxu0
    %v203 = vadd.f32 0.0, %v202
    %v204 = vpop.f32.mrf.mxu0
    %205 = vdwg.mxu0
    %v206 = vmul.f32 %v184, 0.17677669
    %v207 = vmul.f32 %v203, 0.17677669
    %vm208 = vcmask 64512
    %v209 = vsel %vm208, %v206, -inf
    %210 = vmax.xlane.f32.xlu0 %v209
    %v211 = vpop.xlane.xlu0 %210
    %v212 = vsel %vm208, %v207, -inf
    %213 = vmax.xlane.f32.xlu0 %v212
    %v214 = vpop.xlane.xlu0 %213
    %v215 = vsub.f32 %v206, %v211
    %v216 = vsub.f32 %v207, %v214
    %v217 = vmul.f32 %v215, 1.442695
    %v218 = vpow.pop %v217
    %v219 = vmul.f32 %v216, 1.442695
    %v220 = vpow.pop %v219
    %v221 = vsel %vm208, %v218, 0.0
    %222 = vadd.xlane.f32.xlu0 %v221
    %v223 = vpop.xlane.xlu0 %222
    %v224 = vsel %vm208, %v220, 0.0
    %225 = vadd.xlane.f32.xlu0 %v224
    %v226 = vpop.xlane.xlu0 %225
    %v227 = vrcp.pop %v223
    %v228 = vrcp.pop %v226
    %v229 = vmul.f32 %v218, %v227
    %v230 = vmul.f32 %v220, %v228
    %v231 = vpack.c.bf16 %v229, %v229
    %v232 = vpack.c.bf16 %v230, %v230
    %v234 = vsel %vm208, %v231, 0
    %vm236 = vcmask 1043456
    %v238 = vsel %vm236, %v165, 0
    %240 = vmatpush.bf16.msra.mxu0 0
    %241 = vmatpush.bf16.msra.mxu0 0
    %242 = vmatpush.bf16.msra.mxu0 0
    %243 = vmatpush.bf16.msra.mxu0 0
    %244 = vmatpush.bf16.msra.mxu0 0
    %245 = vmatpush.bf16.msra.mxu0 0
    %246 = vmatpush.bf16.msra.mxu0 0
    %247 = vmatpush.bf16.msra.mxu0 %v238
    %248 = vmatmul.bf16.gmra.mxu0 %v234
    %v249 = vpop.f32.mrf.mxu0
    %v250 = vadd.f32 0.0, %v249
    %v251 = vpop.f32.mrf.mxu0
    %252 = vdwg.mxu0
    %v254 = vsel %vm208, %v232, 0
    %v257 = vsel %vm236, %v166, 0
    %259 = vmatpush.bf16.msra.mxu0 0
    %260 = vmatpush.bf16.msra.mxu0 0
    %261 = vmatpush.bf16.msra.mxu0 0
    %262 = vmatpush.bf16.msra.mxu0 0
    %263 = vmatpush.bf16.msra.mxu0 0
    %264 = vmatpush.bf16.msra.mxu0 0
    %265 = vmatpush.bf16.msra.mxu0 0
    %266 = vmatpush.bf16.msra.mxu0 %v257
    %267 = vmatmul.bf16.gmra.mxu0 %v254
    %v268 = vpop.f32.mrf.mxu0
    %v269 = vadd.f32 0.0, %v268
    %v270 = vpop.f32.mrf.mxu0
    %271 = vdwg.mxu0
    %v272 = vpack.c.bf16 %v269, %v250
    %v273 = vld [vmem:[%s7] sm:$0xf]
    %v274 = vld [vmem:[%s7 + $0x4] sm:$0xf]
    %s275 = scalar_lea.vmem %s1, 16
    %v276 = vld [vmem:[%s275] sm:$0xf]
    %v277 = vld [vmem:[%s275 + $0x4] sm:$0xf]
    %v278 = vld [vmem:[%s275 + $0x8] sm:$0xf]
    %v279 = vld [vmem:[%s275 + $0xc] sm:$0xf]
    %s280 = scalar_lea.vmem %s2, 1
    %v281 = vld [vmem:[%s280] sm:$0x1]
    %v283 = vperm.slane %v281, 0
    %v289 = vunpack.c.l.b16 %v276
    %v290 = vunpack.c.l.b16 %v277
    %v291 = vunpack.c.l.b16 %v278
    %v292 = vunpack.c.l.b16 %v279
    %v293 = vpack.c.b16 %v290, %v289
    %v294 = vpack.c.b16 %v292, %v291
    %297 = vmatpush.bf16.msra.mxu0 0
    %298 = vmatpush.bf16.msra.mxu0 0
    %299 = vmatpush.bf16.msra.mxu0 0
    %300 = vmatpush.bf16.msra.mxu0 0
    %301 = vmatpush.bf16.msra.mxu0 0
    %302 = vmatpush.bf16.msra.mxu0 0
    %303 = vmatpush.bf16.msra.mxu0 %v294
    %304 = vmatpush.bf16.msra.mxu0 %v293
    %305 = vmatmul.bf16.gmra.mxu0 %v77
    %v306 = vpop.f32.mrf.mxu0
    %v307 = vadd.f32 %v283, %v306
    %v308 = vpop.f32.mrf.mxu0
    %v309 = vadd.f32 %v283, %v308
    %310 = vdwg.mxu0
    %s311 = scalar_lea.vmem %s3, 16
    %v312 = vld [vmem:[%s311] sm:$0xf]
    %v313 = vld [vmem:[%s311 + $0x4] sm:$0xf]
    %v314 = vld [vmem:[%s311 + $0x8] sm:$0xf]
    %v315 = vld [vmem:[%s311 + $0xc] sm:$0xf]
    %s316 = scalar_lea.vmem %s4, 1
    %v317 = vld [vmem:[%s316] sm:$0x1]
    %v319 = vperm.slane %v317, 0
    %v325 = vunpack.c.l.b16 %v312
    %v326 = vunpack.c.l.b16 %v313
    %v327 = vunpack.c.l.b16 %v314
    %v328 = vunpack.c.l.b16 %v315
    %v329 = vpack.c.b16 %v326, %v325
    %v330 = vpack.c.b16 %v328, %v327
    %333 = vmatpush.bf16.msra.mxu0 0
    %334 = vmatpush.bf16.msra.mxu0 0
    %335 = vmatpush.bf16.msra.mxu0 0
    %336 = vmatpush.bf16.msra.mxu0 0
    %337 = vmatpush.bf16.msra.mxu0 0
    %338 = vmatpush.bf16.msra.mxu0 0
    %339 = vmatpush.bf16.msra.mxu0 %v330
    %340 = vmatpush.bf16.msra.mxu0 %v329
    %341 = vmatmul.bf16.gmra.mxu0 %v77
    %v342 = vpop.f32.mrf.mxu0
    %v343 = vadd.f32 %v319, %v342
    %v344 = vpop.f32.mrf.mxu0
    %v345 = vadd.f32 %v319, %v344
    %346 = vdwg.mxu0
    %s347 = scalar_lea.vmem %s5, 16
    %v348 = vld [vmem:[%s347] sm:$0xf]
    %v349 = vld [vmem:[%s347 + $0x4] sm:$0xf]
    %v350 = vld [vmem:[%s347 + $0x8] sm:$0xf]
    %v351 = vld [vmem:[%s347 + $0xc] sm:$0xf]
    %s352 = scalar_lea.vmem %s6, 1
    %v353 = vld [vmem:[%s352] sm:$0x1]
    %v355 = vperm.slane %v353, 0
    %v361 = vunpack.c.l.b16 %v348
    %v362 = vunpack.c.l.b16 %v349
    %v363 = vunpack.c.l.b16 %v350
    %v364 = vunpack.c.l.b16 %v351
    %v365 = vpack.c.b16 %v362, %v361
    %v366 = vpack.c.b16 %v364, %v363
    %369 = vmatpush.bf16.msra.mxu0 0
    %370 = vmatpush.bf16.msra.mxu0 0
    %371 = vmatpush.bf16.msra.mxu0 0
    %372 = vmatpush.bf16.msra.mxu0 0
    %373 = vmatpush.bf16.msra.mxu0 0
    %374 = vmatpush.bf16.msra.mxu0 0
    %375 = vmatpush.bf16.msra.mxu0 %v366
    %376 = vmatpush.bf16.msra.mxu0 %v365
    %377 = vmatmul.bf16.gmra.mxu0 %v77
    %v378 = vpop.f32.mrf.mxu0
    %v379 = vadd.f32 %v355, %v378
    %v380 = vpop.f32.mrf.mxu0
    %v381 = vadd.f32 %v355, %v380
    %382 = vdwg.mxu0
    %v383 = vpack.c.bf16 %v307, %v307
    %v384 = vpack.c.bf16 %v309, %v309
    %v385 = vpack.c.bf16 %v343, %v343
    %v386 = vpack.c.bf16 %v345, %v345
    %v387 = vpack.c.bf16 %v379, %v379
    %v388 = vpack.c.bf16 %v381, %v381
    %v390 = vsel %vm167, %v383, 0
    %v393 = vsel %vm167, %v385, 0
    %395 = vmatpush.bf16.xpose.msra.mxu0 0
    %396 = vmatpush.bf16.xpose.msra.mxu0 0
    %397 = vmatpush.bf16.xpose.msra.mxu0 0
    %398 = vmatpush.bf16.xpose.msra.mxu0 0
    %399 = vmatpush.bf16.xpose.msra.mxu0 0
    %400 = vmatpush.bf16.xpose.msra.mxu0 0
    %401 = vmatpush.bf16.xpose.msra.mxu0 0
    %402 = vmatpush.bf16.xpose.msra.mxu0 %v393
    %403 = vmatmul.bf16.gmra.mxu0 %v390
    %v404 = vpop.f32.mrf.mxu0
    %v405 = vadd.f32 0.0, %v404
    %v406 = vpop.f32.mrf.mxu0
    %407 = vdwg.mxu0
    %v409 = vsel %vm167, %v384, 0
    %v412 = vsel %vm167, %v386, 0
    %414 = vmatpush.bf16.xpose.msra.mxu0 0
    %415 = vmatpush.bf16.xpose.msra.mxu0 0
    %416 = vmatpush.bf16.xpose.msra.mxu0 0
    %417 = vmatpush.bf16.xpose.msra.mxu0 0
    %418 = vmatpush.bf16.xpose.msra.mxu0 0
    %419 = vmatpush.bf16.xpose.msra.mxu0 0
    %420 = vmatpush.bf16.xpose.msra.mxu0 0
    %421 = vmatpush.bf16.xpose.msra.mxu0 %v412
    %422 = vmatmul.bf16.gmra.mxu0 %v409
    %v423 = vpop.f32.mrf.mxu0
    %v424 = vadd.f32 0.0, %v423
    %v425 = vpop.f32.mrf.mxu0
    %426 = vdwg.mxu0
    %v427 = vmul.f32 %v405, 0.17677669
    %v428 = vmul.f32 %v424, 0.17677669
    %v429 = vsel %vm208, %v427, -inf
    %430 = vmax.xlane.f32.xlu0 %v429
    %v431 = vpop.xlane.xlu0 %430
    %v432 = vsel %vm208, %v428, -inf
    %433 = vmax.xlane.f32.xlu0 %v432
    %v434 = vpop.xlane.xlu0 %433
    %v435 = vsub.f32 %v427, %v431
    %v436 = vsub.f32 %v428, %v434
    %v437 = vmul.f32 %v435, 1.442695
    %v438 = vpow.pop %v437
    %v439 = vmul.f32 %v436, 1.442695
    %v440 = vpow.pop %v439
    %v441 = vsel %vm208, %v438, 0.0
    %442 = vadd.xlane.f32.xlu0 %v441
    %v443 = vpop.xlane.xlu0 %442
    %v444 = vsel %vm208, %v440, 0.0
    %445 = vadd.xlane.f32.xlu0 %v444
    %v446 = vpop.xlane.xlu0 %445
    %v447 = vrcp.pop %v443
    %v448 = vrcp.pop %v446
    %v449 = vmul.f32 %v438, %v447
    %v450 = vmul.f32 %v440, %v448
    %v451 = vpack.c.bf16 %v449, %v449
    %v452 = vpack.c.bf16 %v450, %v450
    %v454 = vsel %vm208, %v451, 0
    %v457 = vsel %vm236, %v387, 0
    %459 = vmatpush.bf16.msra.mxu0 0
    %460 = vmatpush.bf16.msra.mxu0 0
    %461 = vmatpush.bf16.msra.mxu0 0
    %462 = vmatpush.bf16.msra.mxu0 0
    %463 = vmatpush.bf16.msra.mxu0 0
    %464 = vmatpush.bf16.msra.mxu0 0
    %465 = vmatpush.bf16.msra.mxu0 0
    %466 = vmatpush.bf16.msra.mxu0 %v457
    %467 = vmatmul.bf16.gmra.mxu0 %v454
    %v468 = vpop.f32.mrf.mxu0
    %v469 = vadd.f32 0.0, %v468
    %v470 = vpop.f32.mrf.mxu0
    %471 = vdwg.mxu0
    %v473 = vsel %vm208, %v452, 0
    %v476 = vsel %vm236, %v388, 0
    %478 = vmatpush.bf16.msra.mxu0 0
    %479 = vmatpush.bf16.msra.mxu0 0
    %480 = vmatpush.bf16.msra.mxu0 0
    %481 = vmatpush.bf16.msra.mxu0 0
    %482 = vmatpush.bf16.msra.mxu0 0
    %483 = vmatpush.bf16.msra.mxu0 0
    %484 = vmatpush.bf16.msra.mxu0 0
    %485 = vmatpush.bf16.msra.mxu0 %v476
    %486 = vmatmul.bf16.gmra.mxu0 %v473
    %v487 = vpop.f32.mrf.mxu0
    %v488 = vadd.f32 0.0, %v487
    %v489 = vpop.f32.mrf.mxu0
    %490 = vdwg.mxu0
    %v491 = vpack.c.bf16 %v488, %v469
    %s492 = scalar_lea.vmem %s7, 8
    %v493 = vld [vmem:[%s492] sm:$0xf]
    %v494 = vld [vmem:[%s492 + $0x4] sm:$0xf]
    %v497 = vunpack.c.l.b16 %v493
    %v498 = vunpack.c.l.b16 %v494
    %v499 = vpack.c.b16 %v498, %v497
    %v502 = vsel %vm167, %v491, 0
    %504 = vmatpush.bf16.msra.mxu0 0
    %505 = vmatpush.bf16.msra.mxu0 0
    %506 = vmatpush.bf16.msra.mxu0 0
    %507 = vmatpush.bf16.msra.mxu0 0
    %508 = vmatpush.bf16.msra.mxu0 0
    %509 = vmatpush.bf16.msra.mxu0 0
    %510 = vmatpush.bf16.msra.mxu0 0
    %511 = vmatpush.bf16.msra.mxu0 %v499
    %512 = vmatmul.bf16.gmra.mxu0 %v502
    %v513 = vpop.f32.mrf.mxu0
    %v514 = vadd.f32 0.0, %v513
    %v515 = vpop.f32.mrf.mxu0
    %v516 = vadd.f32 0.0, %v515
    %517 = vdwg.mxu0
    %v520 = vunpack.c.l.b16 %v273
    %v521 = vunpack.c.l.b16 %v274
    %v522 = vpack.c.b16 %v521, %v520
    %v525 = vsel %vm167, %v272, 0
    %527 = vmatpush.bf16.msra.mxu0 0
    %528 = vmatpush.bf16.msra.mxu0 0
    %529 = vmatpush.bf16.msra.mxu0 0
    %530 = vmatpush.bf16.msra.mxu0 0
    %531 = vmatpush.bf16.msra.mxu0 0
    %532 = vmatpush.bf16.msra.mxu0 0
    %533 = vmatpush.bf16.msra.mxu0 0
    %534 = vmatpush.bf16.msra.mxu0 %v522
    %535 = vmatmul.bf16.gmra.mxu0 %v525
    %v536 = vpop.f32.mrf.mxu0
    %v537 = vadd.f32 %v514, %v536
    %v538 = vpop.f32.mrf.mxu0
    %v539 = vadd.f32 %v516, %v538
    %540 = vdwg.mxu0
    %v541 = vld [vmem:[%s8] sm:$0x1]
    %v543 = vperm.slane %v541, 0
    %v545 = vadd.f32 %v537, %v543
    %v546 = vadd.f32 %v539, %v543
    %v547 = vadd.f32 %v545, %v52
    %v548 = vadd.f32 %v546, %v53
    %v549 = vld [vmem:[%s13] sm:$0x1]
    %v550 = vld [vmem:[%s14] sm:$0x1]
    %v551 = vsel %vm75, %v547, 0.0
    %552 = vadd.xlane.f32.xlu0 %v551
    %v553 = vpop.xlane.xlu0 %552
    %v554 = vsel %vm75, %v548, 0.0
    %555 = vadd.xlane.f32.xlu0 %v554
    %v556 = vpop.xlane.xlu0 %555
    %v557 = vrcp.pop 32.0
    %v558 = vmul.f32 32.0, %v557
    %v559 = vsub.f32 1.0, %v558
    %v560 = vmul.f32 %v557, %v559
    %v561 = vadd.f32 %v557, %v560
    %vm562 = vweird.f32 %v557
    %v563 = vsel %vm562, %v557, %v561
    %v564 = vmul.f32 %v553, %v563
    %v565 = vmul.f32 %v556, %v563
    %v566 = vsub.f32 %v547, %v564
    %v567 = vsub.f32 %v548, %v565
    %v568 = vmul.f32 %v566, %v566
    %v569 = vmul.f32 %v567, %v567
    %v570 = vsel %vm75, %v568, 0.0
    %571 = vadd.xlane.f32.xlu0 %v570
    %v572 = vpop.xlane.xlu0 %571
    %v573 = vsel %vm75, %v569, 0.0
    %574 = vadd.xlane.f32.xlu0 %v573
    %v575 = vpop.xlane.xlu0 %574
    %v576 = vmul.f32 %v572, %v563
    %v577 = vmul.f32 %v575, %v563
    %v578 = vadd.f32 %v576, 1e-05
    %v579 = vadd.f32 %v577, 1e-05
    %v580 = vrsqrt.pop %v578
    %v581 = vmul.f32 %v580, %v578
    %v582 = vmul.f32 %v581, %v580
    %v583 = vmul.f32 0.5, %v582
    %v584 = vsub.f32 1.5, %v583
    %v585 = vmul.f32 %v580, %v584
    %vm586 = vweird.f32 %v578
    %vm587 = vweird.f32 %v580
    %vm588 = vmor %vm586, %vm587
    %v589 = vsel %vm588, %v580, %v585
    %v590 = vrsqrt.pop %v579
    %v591 = vmul.f32 %v590, %v579
    %v592 = vmul.f32 %v591, %v590
    %v593 = vmul.f32 0.5, %v592
    %v594 = vsub.f32 1.5, %v593
    %v595 = vmul.f32 %v590, %v594
    %vm596 = vweird.f32 %v579
    %vm597 = vweird.f32 %v590
    %vm598 = vmor %vm596, %vm597
    %v599 = vsel %vm598, %v590, %v595
    %v600 = vmul.f32 %v566, %v589
    %v601 = vmul.f32 %v567, %v599
    %v603 = vperm.slane %v549, 0
    %v605 = vmul.f32 %v600, %v603
    %v606 = vmul.f32 %v601, %v603
    %v608 = vperm.slane %v550, 0
    %v610 = vadd.f32 %v605, %v608
    %v611 = vadd.f32 %v606, %v608
    %v612 = vpack.c.bf16 %v611, %v610
    %v613 = vld [vmem:[%s9] sm:$0xf]
    %v614 = vld [vmem:[%s9 + $0x4] sm:$0xf]
    %v615 = vld [vmem:[%s9 + $0x8] sm:$0xf]
    %v616 = vld [vmem:[%s9 + $0xc] sm:$0xf]
    %v617 = vld [vmem:[%s10] sm:$0x1]
    %v619 = vperm.slane %v617, 0
    %v625 = vunpack.c.l.b16 %v613
    %v626 = vunpack.c.l.b16 %v614
    %v627 = vunpack.c.l.b16 %v615
    %v628 = vunpack.c.l.b16 %v616
    %v629 = vpack.c.b16 %v626, %v625
    %v630 = vpack.c.b16 %v628, %v627
    %v634 = vsel %vm75, %v612, 0
    %636 = vmatpush.bf16.msra.mxu0 0
    %637 = vmatpush.bf16.msra.mxu0 0
    %638 = vmatpush.bf16.msra.mxu0 0
    %639 = vmatpush.bf16.msra.mxu0 0
    %640 = vmatpush.bf16.msra.mxu0 0
    %641 = vmatpush.bf16.msra.mxu0 0
    %642 = vmatpush.bf16.msra.mxu0 %v630
    %643 = vmatpush.bf16.msra.mxu0 %v629
    %644 = vmatmul.bf16.gmra.mxu0 %v634
    %v645 = vpop.f32.mrf.mxu0
    %v646 = vadd.f32 %v619, %v645
    %v647 = vpop.f32.mrf.mxu0
    %v648 = vadd.f32 %v619, %v647
    %649 = vdwg.mxu0
    %v650 = vmax.f32 %v646, 0.0
    %v651 = vmax.f32 %v648, 0.0
    %v652 = vpack.c.bf16 %v651, %v650
    %v653 = vld [vmem:[%s11] sm:$0xf]
    %v654 = vld [vmem:[%s11 + $0x4] sm:$0xf]
    %v655 = vld [vmem:[%s11 + $0x8] sm:$0xf]
    %v656 = vld [vmem:[%s11 + $0xc] sm:$0xf]
    %v657 = vld [vmem:[%s11 + $0x10] sm:$0xf]
    %v658 = vld [vmem:[%s11 + $0x14] sm:$0xf]
    %v659 = vld [vmem:[%s11 + $0x18] sm:$0xf]
    %v660 = vld [vmem:[%s11 + $0x1c] sm:$0xf]
    %v661 = vld [vmem:[%s12] sm:$0x1]
    %v663 = vperm.slane %v661, 0
    %v673 = vunpack.c.l.b16 %v653
    %v674 = vunpack.c.l.b16 %v654
    %v675 = vunpack.c.l.b16 %v655
    %v676 = vunpack.c.l.b16 %v656
    %v677 = vunpack.c.l.b16 %v657
    %v678 = vunpack.c.l.b16 %v658
    %v679 = vunpack.c.l.b16 %v659
    %v680 = vunpack.c.l.b16 %v660
    %v681 = vpack.c.b16 %v674, %v673
    %v682 = vpack.c.b16 %v676, %v675
    %v683 = vpack.c.b16 %v678, %v677
    %v684 = vpack.c.b16 %v680, %v679
    %vm689 = vcmask 523264
    %v691 = vsel %vm689, %v652, 0
    %693 = vmatpush.bf16.msra.mxu0 0
    %694 = vmatpush.bf16.msra.mxu0 0
    %695 = vmatpush.bf16.msra.mxu0 0
    %696 = vmatpush.bf16.msra.mxu0 0
    %697 = vmatpush.bf16.msra.mxu0 %v684
    %698 = vmatpush.bf16.msra.mxu0 %v683
    %699 = vmatpush.bf16.msra.mxu0 %v682
    %700 = vmatpush.bf16.msra.mxu0 %v681
    %701 = vmatmul.bf16.gmra.mxu0 %v691
    %v702 = vpop.f32.mrf.mxu0
    %v703 = vadd.f32 %v663, %v702
    %v704 = vpop.f32.mrf.mxu0
    %v705 = vadd.f32 %v663, %v704
    %706 = vdwg.mxu0
    %v707 = vadd.f32 %v610, %v703
    %v708 = vadd.f32 %v611, %v705
    %v709 = vsel %vm75, %v707, 0.0
    %710 = vadd.xlane.f32.xlu0 %v709
    %v711 = vpop.xlane.xlu0 %710
    %v712 = vsel %vm75, %v708, 0.0
    %713 = vadd.xlane.f32.xlu0 %v712
    %v714 = vpop.xlane.xlu0 %713
    %v715 = vmul.f32 %v711, %v563
    %v716 = vmul.f32 %v714, %v563
    %v717 = vsub.f32 %v707, %v715
    %v718 = vsub.f32 %v708, %v716
    %v719 = vmul.f32 %v717, %v717
    %v720 = vmul.f32 %v718, %v718
    %v721 = vsel %vm75, %v719, 0.0
    %722 = vadd.xlane.f32.xlu0 %v721
    %v723 = vpop.xlane.xlu0 %722
    %v724 = vsel %vm75, %v720, 0.0
    %725 = vadd.xlane.f32.xlu0 %v724
    %v726 = vpop.xlane.xlu0 %725
    %v727 = vmul.f32 %v723, %v563
    %v728 = vmul.f32 %v726, %v563
    %v729 = vadd.f32 %v727, 1e-05
    %v730 = vadd.f32 %v728, 1e-05
    %v731 = vrsqrt.pop %v729
    %v732 = vmul.f32 %v731, %v729
    %v733 = vmul.f32 %v732, %v731
    %v734 = vmul.f32 0.5, %v733
    %v735 = vsub.f32 1.5, %v734
    %v736 = vmul.f32 %v731, %v735
    %vm737 = vweird.f32 %v729
    %vm738 = vweird.f32 %v731
    %vm739 = vmor %vm737, %vm738
    %v740 = vsel %vm739, %v731, %v736
    %v741 = vrsqrt.pop %v730
    %v742 = vmul.f32 %v741, %v730
    %v743 = vmul.f32 %v742, %v741
    %v744 = vmul.f32 0.5, %v743
    %v745 = vsub.f32 1.5, %v744
    %v746 = vmul.f32 %v741, %v745
    %vm747 = vweird.f32 %v730
    %vm748 = vweird.f32 %v741
    %vm749 = vmor %vm747, %vm748
    %v750 = vsel %vm749, %v741, %v746
    %v751 = vmul.f32 %v717, %v740
    %v752 = vmul.f32 %v718, %v750
    %v753 = vmul.f32 %v751, %v603
    %v754 = vmul.f32 %v752, %v603
    %v755 = vadd.f32 %v753, %v608
    %v756 = vadd.f32 %v754, %v608
    %v757 = vpack.c.bf16 %v756, %v755
    %s758 = scalar_lea.vmem %s1, 32
    %v759 = vld [vmem:[%s758] sm:$0xf]
    %v760 = vld [vmem:[%s758 + $0x4] sm:$0xf]
    %v761 = vld [vmem:[%s758 + $0x8] sm:$0xf]
    %v762 = vld [vmem:[%s758 + $0xc] sm:$0xf]
    %s763 = scalar_lea.vmem %s2, 2
    %v764 = vld [vmem:[%s763] sm:$0x1]
    %v766 = vperm.slane %v764, 0
    %v772 = vunpack.c.l.b16 %v759
    %v773 = vunpack.c.l.b16 %v760
    %v774 = vunpack.c.l.b16 %v761
    %v775 = vunpack.c.l.b16 %v762
    %v776 = vpack.c.b16 %v773, %v772
    %v777 = vpack.c.b16 %v775, %v774
    %v781 = vsel %vm75, %v757, 0
    %783 = vmatpush.bf16.msra.mxu0 0
    %784 = vmatpush.bf16.msra.mxu0 0
    %785 = vmatpush.bf16.msra.mxu0 0
    %786 = vmatpush.bf16.msra.mxu0 0
    %787 = vmatpush.bf16.msra.mxu0 0
    %788 = vmatpush.bf16.msra.mxu0 0
    %789 = vmatpush.bf16.msra.mxu0 %v777
    %790 = vmatpush.bf16.msra.mxu0 %v776
    %791 = vmatmul.bf16.gmra.mxu0 %v781
    %v792 = vpop.f32.mrf.mxu0
    %v793 = vadd.f32 %v766, %v792
    %v794 = vpop.f32.mrf.mxu0
    %v795 = vadd.f32 %v766, %v794
    %796 = vdwg.mxu0
    %s797 = scalar_lea.vmem %s3, 32
    %v798 = vld [vmem:[%s797] sm:$0xf]
    %v799 = vld [vmem:[%s797 + $0x4] sm:$0xf]
    %v800 = vld [vmem:[%s797 + $0x8] sm:$0xf]
    %v801 = vld [vmem:[%s797 + $0xc] sm:$0xf]
    %s802 = scalar_lea.vmem %s4, 2
    %v803 = vld [vmem:[%s802] sm:$0x1]
    %v805 = vperm.slane %v803, 0
    %v811 = vunpack.c.l.b16 %v798
    %v812 = vunpack.c.l.b16 %v799
    %v813 = vunpack.c.l.b16 %v800
    %v814 = vunpack.c.l.b16 %v801
    %v815 = vpack.c.b16 %v812, %v811
    %v816 = vpack.c.b16 %v814, %v813
    %819 = vmatpush.bf16.msra.mxu0 0
    %820 = vmatpush.bf16.msra.mxu0 0
    %821 = vmatpush.bf16.msra.mxu0 0
    %822 = vmatpush.bf16.msra.mxu0 0
    %823 = vmatpush.bf16.msra.mxu0 0
    %824 = vmatpush.bf16.msra.mxu0 0
    %825 = vmatpush.bf16.msra.mxu0 %v816
    %826 = vmatpush.bf16.msra.mxu0 %v815
    %827 = vmatmul.bf16.gmra.mxu0 %v781
    %v828 = vpop.f32.mrf.mxu0
    %v829 = vadd.f32 %v805, %v828
    %v830 = vpop.f32.mrf.mxu0
    %v831 = vadd.f32 %v805, %v830
    %832 = vdwg.mxu0
    %s833 = scalar_lea.vmem %s5, 32
    %v834 = vld [vmem:[%s833] sm:$0xf]
    %v835 = vld [vmem:[%s833 + $0x4] sm:$0xf]
    %v836 = vld [vmem:[%s833 + $0x8] sm:$0xf]
    %v837 = vld [vmem:[%s833 + $0xc] sm:$0xf]
    %s838 = scalar_lea.vmem %s6, 2
    %v839 = vld [vmem:[%s838] sm:$0x1]
    %v841 = vperm.slane %v839, 0
    %v847 = vunpack.c.l.b16 %v834
    %v848 = vunpack.c.l.b16 %v835
    %v849 = vunpack.c.l.b16 %v836
    %v850 = vunpack.c.l.b16 %v837
    %v851 = vpack.c.b16 %v848, %v847
    %v852 = vpack.c.b16 %v850, %v849
    %855 = vmatpush.bf16.msra.mxu0 0
    %856 = vmatpush.bf16.msra.mxu0 0
    %857 = vmatpush.bf16.msra.mxu0 0
    %858 = vmatpush.bf16.msra.mxu0 0
    %859 = vmatpush.bf16.msra.mxu0 0
    %860 = vmatpush.bf16.msra.mxu0 0
    %861 = vmatpush.bf16.msra.mxu0 %v852
    %862 = vmatpush.bf16.msra.mxu0 %v851
    %863 = vmatmul.bf16.gmra.mxu0 %v781
    %v864 = vpop.f32.mrf.mxu0
    %v865 = vadd.f32 %v841, %v864
    %v866 = vpop.f32.mrf.mxu0
    %v867 = vadd.f32 %v841, %v866
    %868 = vdwg.mxu0
    %v869 = vpack.c.bf16 %v793, %v793
    %v870 = vpack.c.bf16 %v795, %v795
    %v871 = vpack.c.bf16 %v829, %v829
    %v872 = vpack.c.bf16 %v831, %v831
    %v873 = vpack.c.bf16 %v865, %v865
    %v874 = vpack.c.bf16 %v867, %v867
    %v876 = vsel %vm167, %v869, 0
    %v879 = vsel %vm167, %v871, 0
    %881 = vmatpush.bf16.xpose.msra.mxu0 0
    %882 = vmatpush.bf16.xpose.msra.mxu0 0
    %883 = vmatpush.bf16.xpose.msra.mxu0 0
    %884 = vmatpush.bf16.xpose.msra.mxu0 0
    %885 = vmatpush.bf16.xpose.msra.mxu0 0
    %886 = vmatpush.bf16.xpose.msra.mxu0 0
    %887 = vmatpush.bf16.xpose.msra.mxu0 0
    %888 = vmatpush.bf16.xpose.msra.mxu0 %v879
    %889 = vmatmul.bf16.gmra.mxu0 %v876
    %v890 = vpop.f32.mrf.mxu0
    %v891 = vadd.f32 0.0, %v890
    %v892 = vpop.f32.mrf.mxu0
    %893 = vdwg.mxu0
    %v895 = vsel %vm167, %v870, 0
    %v898 = vsel %vm167, %v872, 0
    %900 = vmatpush.bf16.xpose.msra.mxu0 0
    %901 = vmatpush.bf16.xpose.msra.mxu0 0
    %902 = vmatpush.bf16.xpose.msra.mxu0 0
    %903 = vmatpush.bf16.xpose.msra.mxu0 0
    %904 = vmatpush.bf16.xpose.msra.mxu0 0
    %905 = vmatpush.bf16.xpose.msra.mxu0 0
    %906 = vmatpush.bf16.xpose.msra.mxu0 0
    %907 = vmatpush.bf16.xpose.msra.mxu0 %v898
    %908 = vmatmul.bf16.gmra.mxu0 %v895
    %v909 = vpop.f32.mrf.mxu0
    %v910 = vadd.f32 0.0, %v909
    %v911 = vpop.f32.mrf.mxu0
    %912 = vdwg.mxu0
    %v913 = vmul.f32 %v891, 0.17677669
    %v914 = vmul.f32 %v910, 0.17677669
    %v915 = vsel %vm208, %v913, -inf
    %916 = vmax.xlane.f32.xlu0 %v915
    %v917 = vpop.xlane.xlu0 %916
    %v918 = vsel %vm208, %v914, -inf
    %919 = vmax.xlane.f32.xlu0 %v918
    %v920 = vpop.xlane.xlu0 %919
    %v921 = vsub.f32 %v913, %v917
    %v922 = vsub.f32 %v914, %v920
    %v923 = vmul.f32 %v921, 1.442695
    %v924 = vpow.pop %v923
    %v925 = vmul.f32 %v922, 1.442695
    %v926 = vpow.pop %v925
    %v927 = vsel %vm208, %v924, 0.0
    %928 = vadd.xlane.f32.xlu0 %v927
    %v929 = vpop.xlane.xlu0 %928
    %v930 = vsel %vm208, %v926, 0.0
    %931 = vadd.xlane.f32.xlu0 %v930
    %v932 = vpop.xlane.xlu0 %931
    %v933 = vrcp.pop %v929
    %v934 = vrcp.pop %v932
    %v935 = vmul.f32 %v924, %v933
    %v936 = vmul.f32 %v926, %v934
    %v937 = vpack.c.bf16 %v935, %v935
    %v938 = vpack.c.bf16 %v936, %v936
    %v940 = vsel %vm208, %v937, 0
    %v943 = vsel %vm236, %v873, 0
    %945 = vmatpush.bf16.msra.mxu0 0
    %946 = vmatpush.bf16.msra.mxu0 0
    %947 = vmatpush.bf16.msra.mxu0 0
    %948 = vmatpush.bf16.msra.mxu0 0
    %949 = vmatpush.bf16.msra.mxu0 0
    %950 = vmatpush.bf16.msra.mxu0 0
    %951 = vmatpush.bf16.msra.mxu0 0
    %952 = vmatpush.bf16.msra.mxu0 %v943
    %953 = vmatmul.bf16.gmra.mxu0 %v940
    %v954 = vpop.f32.mrf.mxu0
    %v955 = vadd.f32 0.0, %v954
    %v956 = vpop.f32.mrf.mxu0
    %957 = vdwg.mxu0
    %v959 = vsel %vm208, %v938, 0
    %v962 = vsel %vm236, %v874, 0
    %964 = vmatpush.bf16.msra.mxu0 0
    %965 = vmatpush.bf16.msra.mxu0 0
    %966 = vmatpush.bf16.msra.mxu0 0
    %967 = vmatpush.bf16.msra.mxu0 0
    %968 = vmatpush.bf16.msra.mxu0 0
    %969 = vmatpush.bf16.msra.mxu0 0
    %970 = vmatpush.bf16.msra.mxu0 0
    %971 = vmatpush.bf16.msra.mxu0 %v962
    %972 = vmatmul.bf16.gmra.mxu0 %v959
    %v973 = vpop.f32.mrf.mxu0
    %v974 = vadd.f32 0.0, %v973
    %v975 = vpop.f32.mrf.mxu0
    %976 = vdwg.mxu0
    %v977 = vpack.c.bf16 %v974, %v955
    %s978 = scalar_lea.vmem %s7, 16
    %v979 = vld [vmem:[%s978] sm:$0xf]
    %v980 = vld [vmem:[%s978 + $0x4] sm:$0xf]
    %s981 = scalar_lea.vmem %s1, 48
    %v982 = vld [vmem:[%s981] sm:$0xf]
    %v983 = vld [vmem:[%s981 + $0x4] sm:$0xf]
    %v984 = vld [vmem:[%s981 + $0x8] sm:$0xf]
    %v985 = vld [vmem:[%s981 + $0xc] sm:$0xf]
    %s986 = scalar_lea.vmem %s2, 3
    %v987 = vld [vmem:[%s986] sm:$0x1]
    %v989 = vperm.slane %v987, 0
    %v995 = vunpack.c.l.b16 %v982
    %v996 = vunpack.c.l.b16 %v983
    %v997 = vunpack.c.l.b16 %v984
    %v998 = vunpack.c.l.b16 %v985
    %v999 = vpack.c.b16 %v996, %v995
    %v1000 = vpack.c.b16 %v998, %v997
    %1003 = vmatpush.bf16.msra.mxu0 0
    %1004 = vmatpush.bf16.msra.mxu0 0
    %1005 = vmatpush.bf16.msra.mxu0 0
    %1006 = vmatpush.bf16.msra.mxu0 0
    %1007 = vmatpush.bf16.msra.mxu0 0
    %1008 = vmatpush.bf16.msra.mxu0 0
    %1009 = vmatpush.bf16.msra.mxu0 %v1000
    %1010 = vmatpush.bf16.msra.mxu0 %v999
    %1011 = vmatmul.bf16.gmra.mxu0 %v781
    %v1012 = vpop.f32.mrf.mxu0
    %v1013 = vadd.f32 %v989, %v1012
    %v1014 = vpop.f32.mrf.mxu0
    %v1015 = vadd.f32 %v989, %v1014
    %1016 = vdwg.mxu0
    %s1017 = scalar_lea.vmem %s3, 48
    %v1018 = vld [vmem:[%s1017] sm:$0xf]
    %v1019 = vld [vmem:[%s1017 + $0x4] sm:$0xf]
    %v1020 = vld [vmem:[%s1017 + $0x8] sm:$0xf]
    %v1021 = vld [vmem:[%s1017 + $0xc] sm:$0xf]
    %s1022 = scalar_lea.vmem %s4, 3
    %v1023 = vld [vmem:[%s1022] sm:$0x1]
    %v1025 = vperm.slane %v1023, 0
    %v1031 = vunpack.c.l.b16 %v1018
    %v1032 = vunpack.c.l.b16 %v1019
    %v1033 = vunpack.c.l.b16 %v1020
    %v1034 = vunpack.c.l.b16 %v1021
    %v1035 = vpack.c.b16 %v1032, %v1031
    %v1036 = vpack.c.b16 %v1034, %v1033
    %1039 = vmatpush.bf16.msra.mxu0 0
    %1040 = vmatpush.bf16.msra.mxu0 0
    %1041 = vmatpush.bf16.msra.mxu0 0
    %1042 = vmatpush.bf16.msra.mxu0 0
    %1043 = vmatpush.bf16.msra.mxu0 0
    %1044 = vmatpush.bf16.msra.mxu0 0
    %1045 = vmatpush.bf16.msra.mxu0 %v1036
    %1046 = vmatpush.bf16.msra.mxu0 %v1035
    %1047 = vmatmul.bf16.gmra.mxu0 %v781
    %v1048 = vpop.f32.mrf.mxu0
    %v1049 = vadd.f32 %v1025, %v1048
    %v1050 = vpop.f32.mrf.mxu0
    %v1051 = vadd.f32 %v1025, %v1050
    %1052 = vdwg.mxu0
    %s1053 = scalar_lea.vmem %s5, 48
    %v1054 = vld [vmem:[%s1053] sm:$0xf]
    %v1055 = vld [vmem:[%s1053 + $0x4] sm:$0xf]
    %v1056 = vld [vmem:[%s1053 + $0x8] sm:$0xf]
    %v1057 = vld [vmem:[%s1053 + $0xc] sm:$0xf]
    %s1058 = scalar_lea.vmem %s6, 3
    %v1059 = vld [vmem:[%s1058] sm:$0x1]
    %v1061 = vperm.slane %v1059, 0
    %v1067 = vunpack.c.l.b16 %v1054
    %v1068 = vunpack.c.l.b16 %v1055
    %v1069 = vunpack.c.l.b16 %v1056
    %v1070 = vunpack.c.l.b16 %v1057
    %v1071 = vpack.c.b16 %v1068, %v1067
    %v1072 = vpack.c.b16 %v1070, %v1069
    %1075 = vmatpush.bf16.msra.mxu0 0
    %1076 = vmatpush.bf16.msra.mxu0 0
    %1077 = vmatpush.bf16.msra.mxu0 0
    %1078 = vmatpush.bf16.msra.mxu0 0
    %1079 = vmatpush.bf16.msra.mxu0 0
    %1080 = vmatpush.bf16.msra.mxu0 0
    %1081 = vmatpush.bf16.msra.mxu0 %v1072
    %1082 = vmatpush.bf16.msra.mxu0 %v1071
    %1083 = vmatmul.bf16.gmra.mxu0 %v781
    %v1084 = vpop.f32.mrf.mxu0
    %v1085 = vadd.f32 %v1061, %v1084
    %v1086 = vpop.f32.mrf.mxu0
    %v1087 = vadd.f32 %v1061, %v1086
    %1088 = vdwg.mxu0
    %v1089 = vpack.c.bf16 %v1013, %v1013
    %v1090 = vpack.c.bf16 %v1015, %v1015
    %v1091 = vpack.c.bf16 %v1049, %v1049
    %v1092 = vpack.c.bf16 %v1051, %v1051
    %v1093 = vpack.c.bf16 %v1085, %v1085
    %v1094 = vpack.c.bf16 %v1087, %v1087
    %v1096 = vsel %vm167, %v1089, 0
    %v1099 = vsel %vm167, %v1091, 0
    %1101 = vmatpush.bf16.xpose.msra.mxu0 0
    %1102 = vmatpush.bf16.xpose.msra.mxu0 0
    %1103 = vmatpush.bf16.xpose.msra.mxu0 0
    %1104 = vmatpush.bf16.xpose.msra.mxu0 0
    %1105 = vmatpush.bf16.xpose.msra.mxu0 0
    %1106 = vmatpush.bf16.xpose.msra.mxu0 0
    %1107 = vmatpush.bf16.xpose.msra.mxu0 0
    %1108 = vmatpush.bf16.xpose.msra.mxu0 %v1099
    %1109 = vmatmul.bf16.gmra.mxu0 %v1096
    %v1110 = vpop.f32.mrf.mxu0
    %v1111 = vadd.f32 0.0, %v1110
    %v1112 = vpop.f32.mrf.mxu0
    %1113 = vdwg.mxu0
    %v1115 = vsel %vm167, %v1090, 0
    %v1118 = vsel %vm167, %v1092, 0
    %1120 = vmatpush.bf16.xpose.msra.mxu0 0
    %1121 = vmatpush.bf16.xpose.msra.mxu0 0
    %1122 = vmatpush.bf16.xpose.msra.mxu0 0
    %1123 = vmatpush.bf16.xpose.msra.mxu0 0
    %1124 = vmatpush.bf16.xpose.msra.mxu0 0
    %1125 = vmatpush.bf16.xpose.msra.mxu0 0
    %1126 = vmatpush.bf16.xpose.msra.mxu0 0
    %1127 = vmatpush.bf16.xpose.msra.mxu0 %v1118
    %1128 = vmatmul.bf16.gmra.mxu0 %v1115
    %v1129 = vpop.f32.mrf.mxu0
    %v1130 = vadd.f32 0.0, %v1129
    %v1131 = vpop.f32.mrf.mxu0
    %1132 = vdwg.mxu0
    %v1133 = vmul.f32 %v1111, 0.17677669
    %v1134 = vmul.f32 %v1130, 0.17677669
    %v1135 = vsel %vm208, %v1133, -inf
    %1136 = vmax.xlane.f32.xlu0 %v1135
    %v1137 = vpop.xlane.xlu0 %1136
    %v1138 = vsel %vm208, %v1134, -inf
    %1139 = vmax.xlane.f32.xlu0 %v1138
    %v1140 = vpop.xlane.xlu0 %1139
    %v1141 = vsub.f32 %v1133, %v1137
    %v1142 = vsub.f32 %v1134, %v1140
    %v1143 = vmul.f32 %v1141, 1.442695
    %v1144 = vpow.pop %v1143
    %v1145 = vmul.f32 %v1142, 1.442695
    %v1146 = vpow.pop %v1145
    %v1147 = vsel %vm208, %v1144, 0.0
    %1148 = vadd.xlane.f32.xlu0 %v1147
    %v1149 = vpop.xlane.xlu0 %1148
    %v1150 = vsel %vm208, %v1146, 0.0
    %1151 = vadd.xlane.f32.xlu0 %v1150
    %v1152 = vpop.xlane.xlu0 %1151
    %v1153 = vrcp.pop %v1149
    %v1154 = vrcp.pop %v1152
    %v1155 = vmul.f32 %v1144, %v1153
    %v1156 = vmul.f32 %v1146, %v1154
    %v1157 = vpack.c.bf16 %v1155, %v1155
    %v1158 = vpack.c.bf16 %v1156, %v1156
    %v1160 = vsel %vm208, %v1157, 0
    %v1163 = vsel %vm236, %v1093, 0
    %1165 = vmatpush.bf16.msra.mxu0 0
    %1166 = vmatpush.bf16.msra.mxu0 0
    %1167 = vmatpush.bf16.msra.mxu0 0
    %1168 = vmatpush.bf16.msra.mxu0 0
    %1169 = vmatpush.bf16.msra.mxu0 0
    %1170 = vmatpush.bf16.msra.mxu0 0
    %1171 = vmatpush.bf16.msra.mxu0 0
    %1172 = vmatpush.bf16.msra.mxu0 %v1163
    %1173 = vmatmul.bf16.gmra.mxu0 %v1160
    %v1174 = vpop.f32.mrf.mxu0
    %v1175 = vadd.f32 0.0, %v1174
    %v1176 = vpop.f32.mrf.mxu0
    %1177 = vdwg.mxu0
    %v1179 = vsel %vm208, %v1158, 0
    %v1182 = vsel %vm236, %v1094, 0
    %1184 = vmatpush.bf16.msra.mxu0 0
    %1185 = vmatpush.bf16.msra.mxu0 0
    %1186 = vmatpush.bf16.msra.mxu0 0
    %1187 = vmatpush.bf16.msra.mxu0 0
    %1188 = vmatpush.bf16.msra.mxu0 0
    %1189 = vmatpush.bf16.msra.mxu0 0
    %1190 = vmatpush.bf16.msra.mxu0 0
    %1191 = vmatpush.bf16.msra.mxu0 %v1182
    %1192 = vmatmul.bf16.gmra.mxu0 %v1179
    %v1193 = vpop.f32.mrf.mxu0
    %v1194 = vadd.f32 0.0, %v1193
    %v1195 = vpop.f32.mrf.mxu0
    %1196 = vdwg.mxu0
    %v1197 = vpack.c.bf16 %v1194, %v1175
    %s1198 = scalar_lea.vmem %s7, 24
    %v1199 = vld [vmem:[%s1198] sm:$0xf]
    %v1200 = vld [vmem:[%s1198 + $0x4] sm:$0xf]
    %v1203 = vunpack.c.l.b16 %v1199
    %v1204 = vunpack.c.l.b16 %v1200
    %v1205 = vpack.c.b16 %v1204, %v1203
    %v1208 = vsel %vm167, %v1197, 0
    %1210 = vmatpush.bf16.msra.mxu0 0
    %1211 = vmatpush.bf16.msra.mxu0 0
    %1212 = vmatpush.bf16.msra.mxu0 0
    %1213 = vmatpush.bf16.msra.mxu0 0
    %1214 = vmatpush.bf16.msra.mxu0 0
    %1215 = vmatpush.bf16.msra.mxu0 0
    %1216 = vmatpush.bf16.msra.mxu0 0
    %1217 = vmatpush.bf16.msra.mxu0 %v1205
    %1218 = vmatmul.bf16.gmra.mxu0 %v1208
    %v1219 = vpop.f32.mrf.mxu0
    %v1220 = vadd.f32 0.0, %v1219
    %v1221 = vpop.f32.mrf.mxu0
    %v1222 = vadd.f32 0.0, %v1221
    %1223 = vdwg.mxu0
    %v1226 = vunpack.c.l.b16 %v979
    %v1227 = vunpack.c.l.b16 %v980
    %v1228 = vpack.c.b16 %v1227, %v1226
    %v1231 = vsel %vm167, %v977, 0
    %1233 = vmatpush.bf16.msra.mxu0 0
    %1234 = vmatpush.bf16.msra.mxu0 0
    %1235 = vmatpush.bf16.msra.mxu0 0
    %1236 = vmatpush.bf16.msra.mxu0 0
    %1237 = vmatpush.bf16.msra.mxu0 0
    %1238 = vmatpush.bf16.msra.mxu0 0
    %1239 = vmatpush.bf16.msra.mxu0 0
    %1240 = vmatpush.bf16.msra.mxu0 %v1228
    %1241 = vmatmul.bf16.gmra.mxu0 %v1231
    %v1242 = vpop.f32.mrf.mxu0
    %v1243 = vadd.f32 %v1220, %v1242
    %v1244 = vpop.f32.mrf.mxu0
    %v1245 = vadd.f32 %v1222, %v1244
    %1246 = vdwg.mxu0
    %s1247 = scalar_lea.vmem %s8, 1
    %v1248 = vld [vmem:[%s1247] sm:$0x1]
    %v1250 = vperm.slane %v1248, 0
    %v1252 = vadd.f32 %v1243, %v1250
    %v1253 = vadd.f32 %v1245, %v1250
    %v1254 = vadd.f32 %v1252, %v755
    %v1255 = vadd.f32 %v1253, %v756
    %s1256 = scalar_lea.vmem %s13, 1
    %v1257 = vld [vmem:[%s1256] sm:$0x1]
    %s1258 = scalar_lea.vmem %s14, 1
    %v1259 = vld [vmem:[%s1258] sm:$0x1]
    %v1260 = vsel %vm75, %v1254, 0.0
    %1261 = vadd.xlane.f32.xlu0 %v1260
    %v1262 = vpop.xlane.xlu0 %1261
    %v1263 = vsel %vm75, %v1255, 0.0
    %1264 = vadd.xlane.f32.xlu0 %v1263
    %v1265 = vpop.xlane.xlu0 %1264
    %v1266 = vmul.f32 %v1262, %v563
    %v1267 = vmul.f32 %v1265, %v563
    %v1268 = vsub.f32 %v1254, %v1266
    %v1269 = vsub.f32 %v1255, %v1267
    %v1270 = vmul.f32 %v1268, %v1268
    %v1271 = vmul.f32 %v1269, %v1269
    %v1272 = vsel %vm75, %v1270, 0.0
    %1273 = vadd.xlane.f32.xlu0 %v1272
    %v1274 = vpop.xlane.xlu0 %1273
    %v1275 = vsel %vm75, %v1271, 0.0
    %1276 = vadd.xlane.f32.xlu0 %v1275
    %v1277 = vpop.xlane.xlu0 %1276
    %v1278 = vmul.f32 %v1274, %v563
    %v1279 = vmul.f32 %v1277, %v563
    %v1280 = vadd.f32 %v1278, 1e-05
    %v1281 = vadd.f32 %v1279, 1e-05
    %v1282 = vrsqrt.pop %v1280
    %v1283 = vmul.f32 %v1282, %v1280
    %v1284 = vmul.f32 %v1283, %v1282
    %v1285 = vmul.f32 0.5, %v1284
    %v1286 = vsub.f32 1.5, %v1285
    %v1287 = vmul.f32 %v1282, %v1286
    %vm1288 = vweird.f32 %v1280
    %vm1289 = vweird.f32 %v1282
    %vm1290 = vmor %vm1288, %vm1289
    %v1291 = vsel %vm1290, %v1282, %v1287
    %v1292 = vrsqrt.pop %v1281
    %v1293 = vmul.f32 %v1292, %v1281
    %v1294 = vmul.f32 %v1293, %v1292
    %v1295 = vmul.f32 0.5, %v1294
    %v1296 = vsub.f32 1.5, %v1295
    %v1297 = vmul.f32 %v1292, %v1296
    %vm1298 = vweird.f32 %v1281
    %vm1299 = vweird.f32 %v1292
    %vm1300 = vmor %vm1298, %vm1299
    %v1301 = vsel %vm1300, %v1292, %v1297
    %v1302 = vmul.f32 %v1268, %v1291
    %v1303 = vmul.f32 %v1269, %v1301
    %v1305 = vperm.slane %v1257, 0
    %v1307 = vmul.f32 %v1302, %v1305
    %v1308 = vmul.f32 %v1303, %v1305
    %v1310 = vperm.slane %v1259, 0
    %v1312 = vadd.f32 %v1307, %v1310
    %v1313 = vadd.f32 %v1308, %v1310
    %v1314 = vpack.c.bf16 %v1313, %v1312
    %s1315 = scalar_lea.vmem %s9, 16
    %v1316 = vld [vmem:[%s1315] sm:$0xf]
    %v1317 = vld [vmem:[%s1315 + $0x4] sm:$0xf]
    %v1318 = vld [vmem:[%s1315 + $0x8] sm:$0xf]
    %v1319 = vld [vmem:[%s1315 + $0xc] sm:$0xf]
    %s1320 = scalar_lea.vmem %s10, 1
    %v1321 = vld [vmem:[%s1320] sm:$0x1]
    %v1323 = vperm.slane %v1321, 0
    %v1329 = vunpack.c.l.b16 %v1316
    %v1330 = vunpack.c.l.b16 %v1317
    %v1331 = vunpack.c.l.b16 %v1318
    %v1332 = vunpack.c.l.b16 %v1319
    %v1333 = vpack.c.b16 %v1330, %v1329
    %v1334 = vpack.c.b16 %v1332, %v1331
    %v1338 = vsel %vm75, %v1314, 0
    %1340 = vmatpush.bf16.msra.mxu0 0
    %1341 = vmatpush.bf16.msra.mxu0 0
    %1342 = vmatpush.bf16.msra.mxu0 0
    %1343 = vmatpush.bf16.msra.mxu0 0
    %1344 = vmatpush.bf16.msra.mxu0 0
    %1345 = vmatpush.bf16.msra.mxu0 0
    %1346 = vmatpush.bf16.msra.mxu0 %v1334
    %1347 = vmatpush.bf16.msra.mxu0 %v1333
    %1348 = vmatmul.bf16.gmra.mxu0 %v1338
    %v1349 = vpop.f32.mrf.mxu0
    %v1350 = vadd.f32 %v1323, %v1349
    %v1351 = vpop.f32.mrf.mxu0
    %v1352 = vadd.f32 %v1323, %v1351
    %1353 = vdwg.mxu0
    %v1354 = vmax.f32 %v1350, 0.0
    %v1355 = vmax.f32 %v1352, 0.0
    %v1356 = vpack.c.bf16 %v1355, %v1354
    %s1357 = scalar_lea.vmem %s11, 32
    %v1358 = vld [vmem:[%s1357] sm:$0xf]
    %v1359 = vld [vmem:[%s1357 + $0x4] sm:$0xf]
    %v1360 = vld [vmem:[%s1357 + $0x8] sm:$0xf]
    %v1361 = vld [vmem:[%s1357 + $0xc] sm:$0xf]
    %v1362 = vld [vmem:[%s1357 + $0x10] sm:$0xf]
    %v1363 = vld [vmem:[%s1357 + $0x14] sm:$0xf]
    %v1364 = vld [vmem:[%s1357 + $0x18] sm:$0xf]
    %v1365 = vld [vmem:[%s1357 + $0x1c] sm:$0xf]
    %s1366 = scalar_lea.vmem %s12, 1
    %v1367 = vld [vmem:[%s1366] sm:$0x1]
    %v1369 = vperm.slane %v1367, 0
    %v1379 = vunpack.c.l.b16 %v1358
    %v1380 = vunpack.c.l.b16 %v1359
    %v1381 = vunpack.c.l.b16 %v1360
    %v1382 = vunpack.c.l.b16 %v1361
    %v1383 = vunpack.c.l.b16 %v1362
    %v1384 = vunpack.c.l.b16 %v1363
    %v1385 = vunpack.c.l.b16 %v1364
    %v1386 = vunpack.c.l.b16 %v1365
    %v1387 = vpack.c.b16 %v1380, %v1379
    %v1388 = vpack.c.b16 %v1382, %v1381
    %v1389 = vpack.c.b16 %v1384, %v1383
    %v1390 = vpack.c.b16 %v1386, %v1385
    %v1396 = vsel %vm689, %v1356, 0
    %1398 = vmatpush.bf16.msra.mxu0 0
    %1399 = vmatpush.bf16.msra.mxu0 0
    %1400 = vmatpush.bf16.msra.mxu0 0
    %1401 = vmatpush.bf16.msra.mxu0 0
    %1402 = vmatpush.bf16.msra.mxu0 %v1390
    %1403 = vmatpush.bf16.msra.mxu0 %v1389
    %1404 = vmatpush.bf16.msra.mxu0 %v1388
    %1405 = vmatpush.bf16.msra.mxu0 %v1387
    %1406 = vmatmul.bf16.gmra.mxu0 %v1396
    %v1407 = vpop.f32.mrf.mxu0
    %v1408 = vadd.f32 %v1369, %v1407
    %v1409 = vpop.f32.mrf.mxu0
    %v1410 = vadd.f32 %v1369, %v1409
    %1411 = vdwg.mxu0
    %v1412 = vadd.f32 %v1312, %v1408
    %v1413 = vadd.f32 %v1313, %v1410
    %v1414 = vsel %vm75, %v1412, 0.0
    %1415 = vadd.xlane.f32.xlu0 %v1414
    %v1416 = vpop.xlane.xlu0 %1415
    %v1417 = vsel %vm75, %v1413, 0.0
    %1418 = vadd.xlane.f32.xlu0 %v1417
    %v1419 = vpop.xlane.xlu0 %1418
    %v1420 = vmul.f32 %v1416, %v563
    %v1421 = vmul.f32 %v1419, %v563
    %v1422 = vsub.f32 %v1412, %v1420
    %v1423 = vsub.f32 %v1413, %v1421
    %v1424 = vmul.f32 %v1422, %v1422
    %v1425 = vmul.f32 %v1423, %v1423
    %v1426 = vsel %vm75, %v1424, 0.0
    %1427 = vadd.xlane.f32.xlu0 %v1426
    %v1428 = vpop.xlane.xlu0 %1427
    %v1429 = vsel %vm75, %v1425, 0.0
    %1430 = vadd.xlane.f32.xlu0 %v1429
    %v1431 = vpop.xlane.xlu0 %1430
    %v1432 = vmul.f32 %v1428, %v563
    %v1433 = vmul.f32 %v1431, %v563
    %v1434 = vadd.f32 %v1432, 1e-05
    %v1435 = vadd.f32 %v1433, 1e-05
    %v1436 = vrsqrt.pop %v1434
    %v1437 = vmul.f32 %v1436, %v1434
    %v1438 = vmul.f32 %v1437, %v1436
    %v1439 = vmul.f32 0.5, %v1438
    %v1440 = vsub.f32 1.5, %v1439
    %v1441 = vmul.f32 %v1436, %v1440
    %vm1442 = vweird.f32 %v1434
    %vm1443 = vweird.f32 %v1436
    %vm1444 = vmor %vm1442, %vm1443
    %v1445 = vsel %vm1444, %v1436, %v1441
    %v1446 = vrsqrt.pop %v1435
    %v1447 = vmul.f32 %v1446, %v1435
    %v1448 = vmul.f32 %v1447, %v1446
    %v1449 = vmul.f32 0.5, %v1448
    %v1450 = vsub.f32 1.5, %v1449
    %v1451 = vmul.f32 %v1446, %v1450
    %vm1452 = vweird.f32 %v1435
    %vm1453 = vweird.f32 %v1446
    %vm1454 = vmor %vm1452, %vm1453
    %v1455 = vsel %vm1454, %v1446, %v1451
    %v1456 = vmul.f32 %v1422, %v1445
    %v1457 = vmul.f32 %v1423, %v1455
    %v1458 = vmul.f32 %v1456, %v1305
    %v1459 = vmul.f32 %v1457, %v1305
    %v1460 = vadd.f32 %v1458, %v1310
    %v1461 = vadd.f32 %v1459, %v1310
    %1462 = vst.msk [vmem:[#allocation2] sm:$0xff] %vm75, %v1460
    %1463 = vst.msk [vmem:[#allocation2 + $0x8] sm:$0xff] %vm75, %v1461
    // Predicated region
    $region62: #{tpu_custom_call.1} parent=1 // pred_check
      _
    $region63: #{tpu_custom_call.1} parent=1 // pred_check_branch
      %1465 = sbr.rel (0) target = $region65
    $region64: #{tpu_custom_call.1} parent=1 // pred_region
      %1467 = vsyncadd [#allocation3], 0
      %s1468 = sshll.u32 [#allocation2], 4
      %s1469 = int_to_ptr.vmem [resolvable:$true] %s1468
      %s1470 = sshll.u32 %s15, 4
      %s1471 = int_to_ptr.hbm [resolvable:$true] %s1470
      %1476 = dma.vmem_to_hbm [thread:$0]  %s1469, 256, %s1471, [#allocation3], 128, 128, 8
    $region65: #{tpu_custom_call.1} parent=1 // pred_fallthru
      _
    // Predicated region
    $region66: #{tpu_custom_call.1} parent=1 // pred_check
      _
    $region67: #{tpu_custom_call.1} parent=1 // pred_check_branch
      %1478 = sbr.rel (0) target = $region69
    $region68: #{tpu_custom_call.1} parent=1 // pred_region
      %1480 = dma.done [#allocation3], 256
    $region69: #{tpu_custom_call.1} parent=1 // pred_fallthru
      _
    %1481 = vsyncpa [#allocation3], 1

</llo_original>
